<compile_context>
chip_gen: v6e
topology: v6e:2x2x1
jax: 0.10.0
libtpu: 0.0.40
codegen_flags: <defaults>
</compile_context>

<pallas_src>
import math
import numpy as np
import jax
import jax.numpy as jnp
from jax.experimental import pallas as pl
from jax.experimental.pallas import tpu as pltpu


def _round_up(x, m):
    return (x + m - 1) // m * m


def _cdiv(a, b):
    return (a + b - 1) // b


def _auto_row_tile(H_out, W_out_pad, Wph, C_in, CO_PAD, n_phases, dmax, Kg, itemsize):
    """Largest row tile whose per-step working set fits a conservative VMEM budget
    (target well under the v7x scoped limit; v5e/v6e have more headroom)."""
    lane_c = max(C_in, 128)                 # channels-last VMEM lane padding
    budget = 10 * 1024 * 1024
    rt = max(1, H_out)
    while rt > 1:
        m = rt * W_out_pad
        in_b = 2 * n_phases * (rt + dmax) * Wph * lane_c * itemsize   # band + halo, 2x buffered
        slab_b = m * max(Kg, 128) * itemsize
        acc_b = m * CO_PAD * 4
        out_b = 2 * m * CO_PAD * itemsize
        if in_b + slab_b + acc_b + out_b <= budget:
            break
        rt = max(1, rt // 2)
    return rt


def _make_kernel(kh, kw, s, RT, W_out_pad, C_in, CO_PAD, group, n_groups, dmax, n_phases):
    Kg = group * C_in
    M = RT * W_out_pad

    def body(xa_ref, xb_ref, w_ref, b_ref, o_ref):
        # xa_ref: (n_phases, RT,  Wph, C_in)  current output-row band, every stride-phase
        # xb_ref: (n_phases, HB,  Wph, C_in)  halo rows just below the band (same array)
        # w_ref : (n_groups, group*C_in, CO_PAD)  resident, pre-scaled weights
        # b_ref : (1, CO_PAD)
        # o_ref : (RT, W_out_pad, CO_PAD)
        xa = xa_ref[...]
        xb = xb_ref[...] if dmax > 0 else None

        # Stitch the halo onto each phase once (contiguous rows only).
        xf = []
        for ph in range(n_phases):
            a = xa[ph]
            if dmax > 0:
                a = jnp.concatenate([a, xb[ph, :dmax]], axis=0)   # (RT + dmax, Wph, C_in)
            xf.append(a)

        b_row = b_ref[...].astype(jnp.float32)                    # (1, CO_PAD)
        acc = None
        tap = 0
        for g in range(n_groups):
            pieces = []
            for _ in range(group):
                i, j = divmod(tap, kw)
                ai, di = i % s, i // s
                aj, dj = j % s, j // s
                ph = ai * s + aj
                pieces.append(xf[ph][di:di + RT, dj:dj + W_out_pad, :])
                tap += 1
            # Fold this tap-group into one MXU contraction of depth Kg.
            slab = pieces[0] if group == 1 else jnp.concatenate(pieces, axis=-1)
            part = jnp.dot(slab.reshape(M, Kg), w_ref[g],
                           preferred_element_type=jnp.float32)
            acc = part + b_row if acc is None else acc + part     # bias folded into init
        o_ref[...] = acc.reshape(RT, W_out_pad, CO_PAD).astype(o_ref.dtype)

    return body


def equal_conv2d(x, weight, bias, scale, stride=1, padding=0, *, row_tile=None):
    """Pallas forward for EqualConv2d.  x: (N, C_in, H, W) NCHW (PyTorch layout)."""
    N, C_in, H, W = x.shape
    C_out, C_in_w, kh, kw = weight.shape
    assert C_in_w == C_in and kh == kw, "square kernels only (as in the module)"
    k, s, p = int(kh), int(stride), int(padding)

    H_out = (H + 2 * p - k) // s + 1
    W_out = (W + 2 * p - k) // s + 1
    assert H_out > 0 and W_out > 0

    dtype = x.dtype
    itemsize = jnp.dtype(dtype).itemsize
    n_phases = s * s
    dmax = (k - 1) // s                      # halo rows/cols per stride-phase
    CO_PAD = _round_up(C_out, 128)           # lane-dense output stores / full MXU N dim
    W_out_pad = _round_up(W_out, 8)          # sublane-aligned (rows, W) <-> (rows*W) merges
    Wph = W_out_pad + dmax                   # per-phase padded width the kernel reads

    # Fold kernel taps into the matmul contraction while K = group*C_in <= 256.
    TAPS = k * k
    group = 1
    for cand in range(1, TAPS + 1):
        if TAPS % cand == 0 and cand * C_in <= 256:
            group = cand
    n_groups = TAPS // group
    Kg = group * C_in

    # Output-row tile per grid step.
    if row_tile is None:
        RT = _auto_row_tile(H_out, W_out_pad, Wph, C_in, CO_PAD, n_phases, dmax, Kg, itemsize)
    else:
        RT = max(1, min(int(row_tile), H_out))
    RT = max(RT, dmax, 1)                    # halo must fit inside the following tile
    n_rt = _cdiv(H_out, RT)
    H_out_pad = n_rt * RT

    # Halo block: smallest size >= dmax whose start offsets stay block-aligned.
    HB = max(dmax, 1)
    while RT % HB != 0:
        HB += 1
    rb = RT // HB

    Hph = n_rt * RT + HB                     # per-phase padded height
    Hp_total, Wp_total = Hph * s, Wph * s

    # --- wrapper glue (one pass): NCHW -> NHWC, pad to the exact extent the kernel
    # reads, then space-to-depth split into stride^2 phases (identity for stride 1)
    # so the kernel only ever takes contiguous slices.
    # TODO(synk): for an NHWC end-to-end model these transposes/pads could be fused
    # into the producing/consuming ops instead of costing an extra HBM pass here.
    x_nhwc = jnp.transpose(x, (0, 2, 3, 1))
    pad_b = max(0, Hp_total - (p + H))
    pad_r = max(0, Wp_total - (p + W))
    x_pad = jnp.pad(x_nhwc, ((0, 0), (p, pad_b), (p, pad_r), (0, 0)))
    x_pad = x_pad[:, :Hp_total, :Wp_total, :]
    x_ph = x_pad.reshape(N, Hph, s, Wph, s, C_in)
    x_ph = jnp.transpose(x_ph, (0, 2, 4, 1, 3, 5))
    x_ph = x_ph.reshape(N * n_phases, Hph, Wph, C_in)

    # Weights: equalized-LR scale applied once, tap-major (i, j, c_in) rows, C_out
    # padded to CO_PAD, grouped for the folded contraction, cast once to compute dtype.
    w = jnp.transpose(weight * scale, (2, 3, 1, 0)).reshape(TAPS * C_in, C_out)
    w = jnp.pad(w, ((0, 0), (0, CO_PAD - C_out)))
    w = w.reshape(n_groups, Kg, CO_PAD).astype(dtype)

    if bias is None:
        b = jnp.zeros((1, CO_PAD), dtype)
    else:
        b = jnp.pad(bias.reshape(1, C_out), ((0, 0), (0, CO_PAD - C_out))).astype(dtype)

    kernel = _make_kernel(k, k, s, RT, W_out_pad, C_in, CO_PAD, group, n_groups, dmax, n_phases)

    flops = 2 * N * H_out_pad * W_out_pad * CO_PAD * n_groups * Kg
    bytes_accessed = (N * n_phases * Hph * Wph * C_in
                      + n_groups * Kg * CO_PAD
                      + N * H_out_pad * W_out_pad * CO_PAD) * itemsize

    out = pl.pallas_call(
        kernel,
        out_shape=jax.ShapeDtypeStruct((N, H_out_pad, W_out_pad, CO_PAD), dtype),
        grid_spec=pltpu.PrefetchScalarGridSpec(
            num_scalar_prefetch=0,
            grid=(N, n_rt),
            in_specs=[
                # current row band of all phases
                pl.BlockSpec((n_phases, RT, Wph, C_in), lambda n, r: (n, r, 0, 0)),
                # halo rows right below the band (same array, small aligned block)
                pl.BlockSpec((n_phases, HB, Wph, C_in),
                             lambda n, r: (n, (r + 1) * rb, 0, 0)),
                # resident pre-scaled weights and bias (same block every step)
                pl.BlockSpec((n_groups, Kg, CO_PAD), lambda n, r: (0, 0, 0)),
                pl.BlockSpec((1, CO_PAD), lambda n, r: (0, 0)),
            ],
            out_specs=pl.BlockSpec((None, RT, W_out_pad, CO_PAD), lambda n, r: (n, r, 0, 0)),
        ),
        compiler_params=pltpu.CompilerParams(
            dimension_semantics=("parallel", "parallel"),
            vmem_limit_bytes=64 * 1024 * 1024,
        ),
        cost_estimate=pl.CostEstimate(
            flops=int(flops), transcendentals=0, bytes_accessed=int(bytes_accessed)),
    )(x_ph, x_ph, w, b)

    # Drop padded rows/cols/channels and go back to PyTorch NCHW output layout.
    out = out[:, :H_out, :W_out, :C_out]
    return jnp.transpose(out, (0, 3, 1, 2))


class EqualConv2d:
    """JAX/Pallas equivalent of the PyTorch EqualConv2d module (forward only)."""

    def __init__(self, in_channel, out_channel, kernel_size,
                 stride=1, padding=0, bias=True, key=None):
        key = jax.random.PRNGKey(0) if key is None else key
        self.weight = jax.random.normal(
            key, (out_channel, in_channel, kernel_size, kernel_size), jnp.float32)
        self.scale = 1 / math.sqrt(in_channel * kernel_size ** 2)
        self.stride = stride
        self.padding = padding
        self.bias = jnp.zeros((out_channel,), jnp.float32) if bias else None

    def __call__(self, x, *, row_tile=None):
        return equal_conv2d(x, self.weight, self.bias, self.scale,
                            self.stride, self.padding, row_tile=row_tile)


def conv2d_reference(x, weight, bias, scale, stride, padding):
    """Independent reference via lax.conv_general_dilated (matches F.conv2d)."""
    out = jax.lax.conv_general_dilated(
        x, weight * scale,
        window_strides=(stride, stride),
        padding=((padding, padding), (padding, padding)),
        dimension_numbers=("NCHW", "OIHW", "NCHW"),
    )
    if bias is not None:
        out = out + bias[None, :, None, None]
    return out


if __name__ == "__main__":
    key = jax.random.PRNGKey(0)
    kx, kw1, kb1, kx2, kw2, kb2 = jax.random.split(key, 6)

    # Case 1: typical StyleGAN conv config at small scale:
    # N=2, C_in=4, 16x16, C_out=8, 3x3, stride 1, padding 1.
    x = jax.random.normal(kx, (2, 4, 16, 16), dtype=jnp.float32)
    model = EqualConv2d(4, 8, 3, stride=1, padding=1, bias=True, key=kw1)
    model.bias = 0.1 * jax.random.normal(kb1, (8,), dtype=jnp.float32)

    out = jax.block_until_ready(model(x))                        # auto row tile
    assert out.shape == (2, 8, 16, 16), out.shape
    out_tiled = jax.block_until_ready(model(x, row_tile=4))      # force multi-tile + halo path
    ref = jax.block_until_ready(
        conv2d_reference(x, model.weight, model.bias, model.scale, 1, 1))
    np.testing.assert_allclose(np.asarray(out), np.asarray(ref), rtol=2e-4, atol=2e-4)
    np.testing.assert_allclose(np.asarray(out_tiled), np.asarray(ref), rtol=2e-4, atol=2e-4)

    # Case 2: strided / odd-sized config exercising the space-to-depth phase path.
    x2 = jax.random.normal(kx2, (1, 3, 9, 9), dtype=jnp.float32)
    model2 = EqualConv2d(3, 5, 3, stride=2, padding=1, bias=True, key=kw2)
    model2.bias = 0.1 * jax.random.normal(kb2, (5,), dtype=jnp.float32)
    out2 = jax.block_until_ready(model2(x2, row_tile=2))
    assert out2.shape == (1, 5, 5, 5), out2.shape
    ref2 = jax.block_until_ready(
        conv2d_reference(x2, model2.weight, model2.bias, model2.scale, 2, 1))
    np.testing.assert_allclose(np.asarray(out2), np.asarray(ref2), rtol=2e-4, atol=2e-4)

    print("KERNEL_OK")
</pallas_src>

<mosaic_0001>
module attributes {stable_mosaic.version = 11 : i64} {
  func.func @body(%arg0: i32, %arg1: i32, %arg2: memref<1x16x18x4xf32, #tpu.memory_space<vmem>>, %arg3: memref<1x2x18x4xf32, #tpu.memory_space<vmem>>, %arg4: memref<1x36x128xf32, #tpu.memory_space<vmem>>, %arg5: memref<1x128xf32, #tpu.memory_space<vmem>>, %arg6: memref<1x16x16x128xf32, #tpu.memory_space<vmem>>) attributes {dimension_semantics = [#tpu.dimension_semantics<parallel>, #tpu.dimension_semantics<parallel>], iteration_bounds = array<i64: 2, 1>, scalar_prefetch = 0 : i64, scratch_operands = 0 : i64, tpu.core_type = #tpu.core_type<tc>, window_params = [{transform_indices = @transform_0, window_bounds = array<i64: 1, 16, 18, 4>}, {transform_indices = @transform_1, window_bounds = array<i64: 1, 2, 18, 4>}, {pipeline_mode = #tpu.pipeline_mode<synchronous>, transform_indices = @transform_2, window_bounds = array<i64: 1, 36, 128>}, {pipeline_mode = #tpu.pipeline_mode<synchronous>, transform_indices = @transform_3, window_bounds = array<i64: 1, 128>}, {transform_indices = @transform_4, window_bounds = array<i64: 1, 16, 16, 128>}]} {
    %c0 = arith.constant 0 : index
    %c0_0 = arith.constant 0 : index
    %c0_1 = arith.constant 0 : index
    %c0_2 = arith.constant 0 : index
    %0 = vector.load %arg2[%c0, %c0_0, %c0_1, %c0_2] : memref<1x16x18x4xf32, #tpu.memory_space<vmem>>, vector<1x16x18x4xf32>
    %c0_3 = arith.constant 0 : index
    %c0_4 = arith.constant 0 : index
    %c0_5 = arith.constant 0 : index
    %c0_6 = arith.constant 0 : index
    %1 = vector.load %arg3[%c0_3, %c0_4, %c0_5, %c0_6] : memref<1x2x18x4xf32, #tpu.memory_space<vmem>>, vector<1x2x18x4xf32>
    %2 = vector.shape_cast %0 : vector<1x16x18x4xf32> to vector<16x18x4xf32>
    %3 = vector.shape_cast %1 : vector<1x2x18x4xf32> to vector<2x18x4xf32>
    %4 = tpu.concatenate %2, %3 in 0 : vector<16x18x4xf32>, vector<2x18x4xf32> -> vector<18x18x4xf32>
    %c0_7 = arith.constant 0 : index
    %c0_8 = arith.constant 0 : index
    %5 = vector.load %arg5[%c0_7, %c0_8] : memref<1x128xf32, #tpu.memory_space<vmem>>, vector<1x128xf32>
    %6 = vector.extract_strided_slice %4 {offsets = [0, 0, 0], sizes = [16, 16, 4], strides = [1, 1, 1]} : vector<18x18x4xf32> to vector<16x16x4xf32>
    %7 = vector.extract_strided_slice %4 {offsets = [0, 1, 0], sizes = [16, 16, 4], strides = [1, 1, 1]} : vector<18x18x4xf32> to vector<16x16x4xf32>
    %8 = vector.extract_strided_slice %4 {offsets = [0, 2, 0], sizes = [16, 16, 4], strides = [1, 1, 1]} : vector<18x18x4xf32> to vector<16x16x4xf32>
    %9 = vector.extract_strided_slice %4 {offsets = [1, 0, 0], sizes = [16, 16, 4], strides = [1, 1, 1]} : vector<18x18x4xf32> to vector<16x16x4xf32>
    %10 = vector.extract_strided_slice %4 {offsets = [1, 1, 0], sizes = [16, 16, 4], strides = [1, 1, 1]} : vector<18x18x4xf32> to vector<16x16x4xf32>
    %11 = vector.extract_strided_slice %4 {offsets = [1, 2, 0], sizes = [16, 16, 4], strides = [1, 1, 1]} : vector<18x18x4xf32> to vector<16x16x4xf32>
    %12 = vector.extract_strided_slice %4 {offsets = [2, 0, 0], sizes = [16, 16, 4], strides = [1, 1, 1]} : vector<18x18x4xf32> to vector<16x16x4xf32>
    %13 = vector.extract_strided_slice %4 {offsets = [2, 1, 0], sizes = [16, 16, 4], strides = [1, 1, 1]} : vector<18x18x4xf32> to vector<16x16x4xf32>
    %14 = vector.extract_strided_slice %4 {offsets = [2, 2, 0], sizes = [16, 16, 4], strides = [1, 1, 1]} : vector<18x18x4xf32> to vector<16x16x4xf32>
    %15 = tpu.concatenate %6, %7, %8, %9, %10, %11, %12, %13, %14 in 2 : vector<16x16x4xf32>, vector<16x16x4xf32>, vector<16x16x4xf32>, vector<16x16x4xf32>, vector<16x16x4xf32>, vector<16x16x4xf32>, vector<16x16x4xf32>, vector<16x16x4xf32>, vector<16x16x4xf32> -> vector<16x16x36xf32>
    %16 = vector.shape_cast %15 : vector<16x16x36xf32> to vector<256x36xf32>
    %c0_9 = arith.constant 0 : index
    %c0_10 = arith.constant 0 : index
    %c0_11 = arith.constant 0 : index
    %17 = vector.load %arg4[%c0_9, %c0_10, %c0_11] : memref<1x36x128xf32, #tpu.memory_space<vmem>>, vector<1x36x128xf32>
    %18 = vector.shape_cast %17 : vector<1x36x128xf32> to vector<36x128xf32>
    %cst = arith.constant dense<0.000000e+00> : vector<256x128xf32>
    %19 = tpu.matmul %16, %18, %cst {dimension_numbers = #tpu.dot_dimension_numbers<[1], [0], [0], [1], [0, 0, 1, 1], [], []>} : vector<256x36xf32>, vector<36x128xf32>, vector<256x128xf32> -> vector<256x128xf32>
    %20 = vector.broadcast %5 : vector<1x128xf32> to vector<256x128xf32>
    %21 = arith.addf %19, %20 : vector<256x128xf32>
    %22 = vector.shape_cast %21 : vector<256x128xf32> to vector<16x16x128xf32>
    %c0_12 = arith.constant 0 : index
    %c0_13 = arith.constant 0 : index
    %c0_14 = arith.constant 0 : index
    %c0_15 = arith.constant 0 : index
    %23 = vector.load %arg6[%c0_12, %c0_13, %c0_14, %c0_15] : memref<1x16x16x128xf32, #tpu.memory_space<vmem>>, vector<1x16x16x128xf32>
    %24 = vector.shape_cast %23 : vector<1x16x16x128xf32> to vector<16x16x128xf32>
    %25 = vector.shape_cast %22 : vector<16x16x128xf32> to vector<1x16x16x128xf32>
    tpu.vector_store %arg6[%c0_12, %c0_13, %c0_14, %c0_15], %25 {strides = array<i32>} : memref<1x16x16x128xf32, #tpu.memory_space<vmem>>, vector<1x16x16x128xf32>,
    return
  }
  func.func @transform_0(%arg0: i32, %arg1: i32) -> (i32, i32, i32, i32) {
    %c0_i32 = arith.constant 0 : i32
    %c0_i32_0 = arith.constant 0 : i32
    %c0_i32_1 = arith.constant 0 : i32
    return %arg0, %arg1, %c0_i32, %c0_i32_0 : i32, i32, i32, i32
  }
  func.func @transform_1(%arg0: i32, %arg1: i32) -> (i32, i32, i32, i32) {
    %c1_i32 = arith.constant 1 : i32
    %0 = arith.addi %arg1, %c1_i32 : i32
    %c8_i32 = arith.constant 8 : i32
    %1 = arith.muli %0, %c8_i32 : i32
    %c0_i32 = arith.constant 0 : i32
    %c0_i32_0 = arith.constant 0 : i32
    %c0_i32_1 = arith.constant 0 : i32
    return %arg0, %1, %c0_i32, %c0_i32_0 : i32, i32, i32, i32
  }
  func.func @transform_2(%arg0: i32, %arg1: i32) -> (i32, i32, i32) {
    %c0_i32 = arith.constant 0 : i32
    %c0_i32_0 = arith.constant 0 : i32
    %c0_i32_1 = arith.constant 0 : i32
    %c0_i32_2 = arith.constant 0 : i32
    return %c0_i32, %c0_i32_0, %c0_i32_1 : i32, i32, i32
  }
  func.func @transform_3(%arg0: i32, %arg1: i32) -> (i32, i32) {
    %c0_i32 = arith.constant 0 : i32
    %c0_i32_0 = arith.constant 0 : i32
    %c0_i32_1 = arith.constant 0 : i32
    return %c0_i32, %c0_i32_0 : i32, i32
  }
  func.func @transform_4(%arg0: i32, %arg1: i32) -> (i32, i32, i32, i32) {
    %c0_i32 = arith.constant 0 : i32
    %c0_i32_0 = arith.constant 0 : i32
    %c0_i32_1 = arith.constant 0 : i32
    return %arg0, %arg1, %c0_i32, %c0_i32_0 : i32, i32, i32, i32
  }
}

</mosaic_0001>

<llo_original>
// kernel: tpu_custom_call.1
$region0: #{tpu_custom_call.1}
  #allocation0 [shape = 'u32[]', space=smem, size = 0x4, offset = 0x4, fixed_abs, tag = 'smem constant byte address 0x4 - core index']
  #allocation1 [shape = 'u32[144,128]{1,0:T(1,128)}', space=vmem, size = 0x12000, scoped, tag = 'internal scratch']
  %s0 = inlined_call_operand.vmem [shape: f32[2,18,18,4], index: 0, kind: input, shape index: {}]
  %s1 = inlined_call_operand.vmem [shape: f32[2,18,18,4], index: 1, kind: input, shape index: {}]
  %s2 = inlined_call_operand.vmem [shape: f32[1,36,128], index: 2, kind: input, shape index: {}]
  %s3 = inlined_call_operand.vmem [shape: f32[1,128], index: 3, kind: input, shape index: {}]
  %s4 = inlined_call_operand.hbm [shape: f32[2,16,16,128], index: 4, kind: output, shape index: {}]
  %s5 = sld [smem:[#allocation0]]
  $region49: #{tpu_custom_call.1} parent=0
    _
  %s7 = ssub.s32 1, %s5
  %s8 = scalar_select 0, %s7, %s5
  $region1: #{tpu_custom_call.1} parent=0
    #allocation2 [shape = 'u8[262144]{0}', space=vmem, size = 0x40000, scoped, tag = 'output window, operand 0']
    #allocation3 [shape = 's32[2]{0}', space=sflag, size = 0x8, scoped, tag = 'scoped memory for tpu_custom_call.1']
    %9 = vsyncpa [#allocation3], 0
    %s10 = scalar_lea.sflag [#allocation3], 1
    %11 = vsyncpa %s10, 0
    loop: start=0, step=1, limit=4
    $region2: #{tpu_custom_call.1} parent=1 // loop_pre_header
      _
    $region3: #{tpu_custom_call.1} parent=1 // loop_header
      %s13 = sphi 0, %s17
      %p14 = scmp.ge.s32.totalorder %s13, 4
      %s20 = sphi 0, %s32
      %s21 = sphi 0, %s28
      %s22 = sphi 0, %s20
      %s23 = sphi 0, %s21
      %s24 = sphi 0, %s22
      %s25 = sphi 0, %s23
      %s37 = sphi 0, %s39
      %s40 = sphi 0, %s37
      %s41 = sphi 0, %s40
      %s57 = sphi 0, %s41
      %s69 = sphi 0, %s71
      %s72 = sphi 0, %s69
      %s73 = sphi 0, %s72
      %s89 = sphi 0, %s73
      %s93 = sphi 0, %s93
      %s95 = sphi 0, %s93
      %s96 = sphi 0, %s95
      %s110 = sphi 0, %s96
      %s114 = sphi 0, %s114
      %s116 = sphi 0, %s114
      %s117 = sphi 0, %s116
      %s131 = sphi 0, %s117
      %s139 = sphi 0, %s141
      %s142 = sphi 0, %s139
      %s143 = sphi 0, %s142
      %s159 = sphi 0, %s143
    $region4: #{tpu_custom_call.1} parent=1 // loop_header_branch
      %16 = sbr.rel (%p14) target = $region8
    $region5: #{tpu_custom_call.1} parent=1 // loop_body
      %s18 = ssub.s32 %s13, 1
      %s19 = ssub.s32 %s13, 2
      %s26 = sadd.s32 1, %s21
      %p27 = scmp.ge.s32.totalorder %s26, 1
      %s28 = scalar_select %p27, 0, %s26
      %s29 = sadd.s32 1, %s20
      %s30 = scalar_select %p27, %s29, %s20
      %p31 = scmp.ge.s32.totalorder %s30, 2
      %s32 = scalar_select %p31, 0, %s30
      %s33 = ssub.s32 %s20, %s32
      %s34 = ssub.s32 %s21, %s28
      %s35 = sor.u32 %s33, %s34
      %p36 = scmp.eq.s32.totalorder %s35, 0
      %s38 = sadd.s32 %s37, 1
      %s39 = scalar_select %p36, %s37, %s38
      %p42 = pneg %p36
      %p43 = scmp.eq.s32.totalorder %s13, 1
      %p44 = por %p42, %p43
      %p45 = scmp.ne.s32.totalorder %s37, %s40
      %p46 = scmp.eq.s32.totalorder %s13, 0
      %p47 = por %p45, %p46
      %p48 = scmp.ne.s32.totalorder %s37, %s40
      %p49 = scmp.eq.s32.totalorder %s18, 1
      %p50 = por %p48, %p49
      %p51 = scmp.ne.s32.totalorder %s40, %s41
      %p52 = scmp.eq.s32.totalorder %s18, 0
      %p53 = por %p51, %p52
      %p54 = scmp.ne.s32.totalorder %s40, %s41
      %p55 = scmp.eq.s32.totalorder %s19, 1
      %p56 = por %p54, %p55
      %p58 = scmp.ne.s32.totalorder %s41, %s57
      %p59 = scmp.eq.s32.totalorder %s19, 0
      %p60 = por %p58, %p59
      %s61 = sadd.s32 %s21, 1
      %s62 = smul.u32 %s61, 8
      %s63 = sadd.s32 %s28, 1
      %s64 = smul.u32 %s63, 8
      %s65 = ssub.s32 %s20, %s32
      %s66 = ssub.s32 %s62, %s64
      %s67 = sor.u32 %s65, %s66
      %p68 = scmp.eq.s32.totalorder %s67, 0
      %s70 = sadd.s32 %s69, 1
      %s71 = scalar_select %p68, %s69, %s70
      %p74 = pneg %p68
      %p75 = scmp.eq.s32.totalorder %s13, 1
      %p76 = por %p74, %p75
      %p77 = scmp.ne.s32.totalorder %s69, %s72
      %p78 = scmp.eq.s32.totalorder %s13, 0
      %p79 = por %p77, %p78
      %p80 = scmp.ne.s32.totalorder %s69, %s72
      %p81 = scmp.eq.s32.totalorder %s18, 1
      %p82 = por %p80, %p81
      %p83 = scmp.ne.s32.totalorder %s72, %s73
      %p84 = scmp.eq.s32.totalorder %s18, 0
      %p85 = por %p83, %p84
      %p86 = scmp.ne.s32.totalorder %s72, %s73
      %p87 = scmp.eq.s32.totalorder %s19, 1
      %p88 = por %p86, %p87
      %p90 = scmp.ne.s32.totalorder %s73, %s89
      %p91 = scmp.eq.s32.totalorder %s19, 0
      %p92 = por %p90, %p91
      %s94 = sadd.s32 %s93, 1
      %p97 = scmp.eq.s32.totalorder %s13, 1
      %p98 = scmp.ne.s32.totalorder %s93, %s95
      %p99 = scmp.eq.s32.totalorder %s13, 0
      %p100 = por %p98, %p99
      %p101 = scmp.ne.s32.totalorder %s93, %s95
      %p102 = scmp.eq.s32.totalorder %s18, 1
      %p103 = por %p101, %p102
      %p104 = scmp.ne.s32.totalorder %s95, %s96
      %p105 = scmp.eq.s32.totalorder %s18, 0
      %p106 = por %p104, %p105
      %p107 = scmp.ne.s32.totalorder %s95, %s96
      %p108 = scmp.eq.s32.totalorder %s19, 1
      %p109 = por %p107, %p108
      %p111 = scmp.ne.s32.totalorder %s96, %s110
      %p112 = scmp.eq.s32.totalorder %s19, 0
      %p113 = por %p111, %p112
      %s115 = sadd.s32 %s114, 1
      %p118 = scmp.eq.s32.totalorder %s13, 1
      %p119 = scmp.ne.s32.totalorder %s114, %s116
      %p120 = scmp.eq.s32.totalorder %s13, 0
      %p121 = por %p119, %p120
      %p122 = scmp.ne.s32.totalorder %s114, %s116
      %p123 = scmp.eq.s32.totalorder %s18, 1
      %p124 = por %p122, %p123
      %p125 = scmp.ne.s32.totalorder %s116, %s117
      %p126 = scmp.eq.s32.totalorder %s18, 0
      %p127 = por %p125, %p126
      %p128 = scmp.ne.s32.totalorder %s116, %s117
      %p129 = scmp.eq.s32.totalorder %s19, 1
      %p130 = por %p128, %p129
      %p132 = scmp.ne.s32.totalorder %s117, %s131
      %p133 = scmp.eq.s32.totalorder %s19, 0
      %p134 = por %p132, %p133
      %s135 = ssub.s32 %s20, %s32
      %s136 = ssub.s32 %s21, %s28
      %s137 = sor.u32 %s135, %s136
      %p138 = scmp.eq.s32.totalorder %s137, 0
      %s140 = sadd.s32 %s139, 1
      %s141 = scalar_select %p138, %s139, %s140
      %p144 = pneg %p138
      %p145 = scmp.eq.s32.totalorder %s13, 1
      %p146 = por %p144, %p145
      %p147 = scmp.ne.s32.totalorder %s139, %s142
      %p148 = scmp.eq.s32.totalorder %s13, 0
      %p149 = por %p147, %p148
      %p150 = scmp.ne.s32.totalorder %s139, %s142
      %p151 = scmp.eq.s32.totalorder %s18, 1
      %p152 = por %p150, %p151
      %p153 = scmp.ne.s32.totalorder %s142, %s143
      %p154 = scmp.eq.s32.totalorder %s18, 0
      %p155 = por %p153, %p154
      %p156 = scmp.ne.s32.totalorder %s142, %s143
      %p157 = scmp.eq.s32.totalorder %s19, 1
      %p158 = por %p156, %p157
      %p160 = scmp.ne.s32.totalorder %s143, %s159
      %p161 = scmp.eq.s32.totalorder %s19, 0
      %p162 = por %p160, %p161
      %p163 = scmp.le.s32.totalorder 1, %s13
      %p164 = scmp.lt.s32.totalorder %s13, 3
      %p165 = pnand %p163, %p164
      %p166 = pneg %p165
      // Predicated region
      $region9: #{tpu_custom_call.1} parent=5 // pred_check
        _
      $region10: #{tpu_custom_call.1} parent=5 // pred_check_branch
        %168 = sbr.rel (%p165) target = $region12
      $region11: #{tpu_custom_call.1} parent=5 // pred_region
        %s169 = ssub.s32 %s13, 1
        // Predicated region
        $region13: #{tpu_custom_call.1} parent=11 // pred_check
          %p170 = pneg %p106
        $region14: #{tpu_custom_call.1} parent=11 // pred_check_branch
          %172 = sbr.rel (%p170) target = $region16
        $region15: #{tpu_custom_call.1} parent=11 // pred_region
          _
        $region16: #{tpu_custom_call.1} parent=11 // pred_fallthru
          _
        // Predicated region
        $region17: #{tpu_custom_call.1} parent=11 // pred_check
          %p173 = pneg %p127
        $region18: #{tpu_custom_call.1} parent=11 // pred_check_branch
          %175 = sbr.rel (%p173) target = $region20
        $region19: #{tpu_custom_call.1} parent=11 // pred_region
          _
        $region20: #{tpu_custom_call.1} parent=11 // pred_fallthru
          _
      $region12: #{tpu_custom_call.1} parent=5 // pred_fallthru
        _
      %p176 = scmp.lt.s32.totalorder %s13, 2
      // Predicated region
      $region21: #{tpu_custom_call.1} parent=5 // pred_check
        %p177 = pneg %p176
      $region22: #{tpu_custom_call.1} parent=5 // pred_check_branch
        %179 = sbr.rel (%p177) target = $region24
      $region23: #{tpu_custom_call.1} parent=5 // pred_region
        // Predicated region
        $region25: #{tpu_custom_call.1} parent=23 // pred_check
          %p180 = pneg %p47
        $region26: #{tpu_custom_call.1} parent=23 // pred_check_branch
          %182 = sbr.rel (%p180) target = $region28
        $region27: #{tpu_custom_call.1} parent=23 // pred_region
          %s183 = smul.u32 16, %s21
          %s184 = ssub.s32 18, %s183
          %p185 = scmp.lt.s32.totalorder %s184, 16
          %s186 = scalar_select %p185, %s184, 16
          %s187 = smul.u32 128, %s186
          %s188 = smul.u32 %s187, 3
          %p189 = scmp.lt.s32.totalorder %s20, 1
          %s190 = scalar_select %p189, %s20, 1
          %p191 = scmp.lt.s32.totalorder %s183, 17
          %s192 = scalar_select %p191, %s183, 17
          %s193 = smul.addr %s192, 3
          %s194 = smul.addr %s190, 54
          %s195 = sadd.s32 %s193, %s194
          %s196 = smul.addr %s195, 8
          %s197 = scalar_lea.vmem %s0, %s196
          %s198 = smul.u32 16, %s21
          %s199 = ssub.s32 18, %s198
          %p200 = scmp.lt.s32.totalorder %s199, 16
          %s201 = scalar_select %p200, %s199, 16
          %s202 = smul.u32 128, %s201
          %s203 = smul.u32 %s202, 3
        $region28: #{tpu_custom_call.1} parent=23 // pred_fallthru
          _
        // Predicated region
        $region29: #{tpu_custom_call.1} parent=23 // pred_check
          %p204 = pneg %p79
        $region30: #{tpu_custom_call.1} parent=23 // pred_check_branch
          %206 = sbr.rel (%p204) target = $region32
        $region31: #{tpu_custom_call.1} parent=23 // pred_region
          %s207 = sadd.s32 %s21, 1
          %s208 = smul.u32 %s207, 8
          %s209 = smul.u32 2, %s208
          %p210 = scmp.lt.s32.totalorder %s20, 1
          %s211 = scalar_select %p210, %s20, 1
          %p212 = scmp.lt.s32.totalorder %s209, 17
          %s213 = scalar_select %p212, %s209, 17
          %s214 = smul.addr %s213, 3
          %s215 = smul.addr %s211, 54
          %s216 = sadd.s32 %s214, %s215
          %s217 = smul.addr %s216, 8
          %s218 = scalar_lea.vmem %s1, %s217
          %s219 = sadd.s32 %s21, 1
          %s220 = smul.u32 %s219, 8
          %s221 = smul.u32 2, %s220
        $region32: #{tpu_custom_call.1} parent=23 // pred_fallthru
          _
      $region24: #{tpu_custom_call.1} parent=5 // pred_fallthru
        _
      %p222 = scmp.le.s32.totalorder 1, %s13
      %p223 = scmp.lt.s32.totalorder %s13, 3
      %p224 = pnand %p222, %p223
      %p225 = pneg %p224
      // Predicated region
      $region33: #{tpu_custom_call.1} parent=5 // pred_check
        _
      $region34: #{tpu_custom_call.1} parent=5 // pred_check_branch
        %227 = sbr.rel (%p224) target = $region36
      $region35: #{tpu_custom_call.1} parent=5 // pred_region
        %s228 = ssub.s32 %s13, 1
        %s229 = smul.u32 16, %s23
        %s230 = ssub.s32 18, %s229
        %p231 = scmp.lt.s32.totalorder %s230, 16
        %s232 = scalar_select %p231, %s230, 16
        %s233 = smul.u32 128, %s232
        %s234 = smul.u32 %s233, 3
        %p235 = scmp.lt.s32.totalorder %s22, 1
        %s236 = scalar_select %p235, %s22, 1
        %p237 = scmp.lt.s32.totalorder %s229, 17
        %s238 = scalar_select %p237, %s229, 17
        %s239 = smul.addr %s238, 3
        %s240 = smul.addr %s236, 54
        %s241 = sadd.s32 %s239, %s240
        %s242 = smul.addr %s241, 8
        %s243 = scalar_lea.vmem %s0, %s242
        %p244 = pneg %p53
        %p245 = pneg %p50
        %s246 = sadd.s32 %s23, 1
        %s247 = smul.u32 %s246, 8
        %s248 = smul.u32 2, %s247
        %p249 = scmp.lt.s32.totalorder %s22, 1
        %s250 = scalar_select %p249, %s22, 1
        %p251 = scmp.lt.s32.totalorder %s248, 17
        %s252 = scalar_select %p251, %s248, 17
        %s253 = smul.addr %s252, 3
        %s254 = smul.addr %s250, 54
        %s255 = sadd.s32 %s253, %s254
        %s256 = smul.addr %s255, 8
        %s257 = scalar_lea.vmem %s1, %s256
        %p258 = pneg %p85
        %p259 = pneg %p82
        %p260 = pneg %p106
        %p261 = pneg %p103
        %p262 = pneg %p127
        %p263 = pneg %p124
        %p264 = pneg %p155
        %p265 = pneg %p152
        %s266 = sand.u32 %s142, 1
        %s267 = scalar_lea.sflag [#allocation3], %s266
        %s268 = sand.u32 %s142, 1
        %s269 = smul.addr %s268, 256
        %s270 = scalar_lea.vmem [#allocation2], %s269
        %s271 = smul.u32 16, %s23
        %s272 = ssub.s32 18, %s271
        %p273 = scmp.lt.s32.totalorder %s272, 16
        %s274 = scalar_select %p273, %s272, 16
        %s275 = smul.u32 128, %s274
        %s276 = smul.u32 %s275, 3
        %p277 = scmp.lt.s32.totalorder %s22, 1
        %s278 = scalar_select %p277, %s22, 1
        %p279 = scmp.lt.s32.totalorder %s271, 17
        %s280 = scalar_select %p279, %s271, 17
        %s281 = smul.addr %s280, 3
        %s282 = smul.addr %s278, 54
        %s283 = sadd.s32 %s281, %s282
        %s284 = smul.addr %s283, 8
        %s285 = scalar_lea.vmem %s0, %s284
        %s286 = smul.u32 16, %s23
        %s287 = ssub.s32 18, %s286
        %p288 = scmp.lt.s32.totalorder %s287, 16
        %s289 = scalar_select %p288, %s287, 16
        %s290 = smul.u32 128, %s289
        %s291 = smul.u32 %s290, 3
        %s292 = sadd.s32 %s23, 1
        %s293 = smul.u32 %s292, 8
        %s294 = smul.u32 2, %s293
        %p295 = scmp.lt.s32.totalorder %s22, 1
        %s296 = scalar_select %p295, %s22, 1
        %p297 = scmp.lt.s32.totalorder %s294, 17
        %s298 = scalar_select %p297, %s294, 17
        %s299 = smul.addr %s298, 3
        %s300 = smul.addr %s296, 54
        %s301 = sadd.s32 %s299, %s300
        %s302 = smul.addr %s301, 8
        %s303 = scalar_lea.vmem %s1, %s302
        %s304 = sadd.s32 %s23, 1
        %s305 = smul.u32 %s304, 8
        %s306 = smul.u32 2, %s305
        %s307 = smul.u32 16, %s23
        %v308 = vld [vmem:[%s285] sm:$0xff]
        %v309 = vld [vmem:[%s285 + $0x8] sm:$0xff]
        %v310 = vld [vmem:[%s285 + $0x10] sm:$0x3]
        %v311 = vld [vmem:[%s285 + $0x18] sm:$0xff]
        %v312 = vld [vmem:[%s285 + $0x20] sm:$0xff]
        %v313 = vld [vmem:[%s285 + $0x28] sm:$0x3]
        %v314 = vld [vmem:[%s285 + $0x30] sm:$0xff]
        %v315 = vld [vmem:[%s285 + $0x38] sm:$0xff]
        %v316 = vld [vmem:[%s285 + $0x40] sm:$0x3]
        %v317 = vld [vmem:[%s285 + $0x48] sm:$0xff]
        %v318 = vld [vmem:[%s285 + $0x50] sm:$0xff]
        %v319 = vld [vmem:[%s285 + $0x58] sm:$0x3]
        %v320 = vld [vmem:[%s285 + $0x60] sm:$0xff]
        %v321 = vld [vmem:[%s285 + $0x68] sm:$0xff]
        %v322 = vld [vmem:[%s285 + $0x70] sm:$0x3]
        %v323 = vld [vmem:[%s285 + $0x78] sm:$0xff]
        %v324 = vld [vmem:[%s285 + $0x80] sm:$0xff]
        %v325 = vld [vmem:[%s285 + $0x88] sm:$0x3]
        %v326 = vld [vmem:[%s285 + $0x90] sm:$0xff]
        %v327 = vld [vmem:[%s285 + $0x98] sm:$0xff]
        %v328 = vld [vmem:[%s285 + $0xa0] sm:$0x3]
        %v329 = vld [vmem:[%s285 + $0xa8] sm:$0xff]
        %v330 = vld [vmem:[%s285 + $0xb0] sm:$0xff]
        %v331 = vld [vmem:[%s285 + $0xb8] sm:$0x3]
        %v332 = vld [vmem:[%s285 + $0xc0] sm:$0xff]
        %v333 = vld [vmem:[%s285 + $0xc8] sm:$0xff]
        %v334 = vld [vmem:[%s285 + $0xd0] sm:$0x3]
        %v335 = vld [vmem:[%s285 + $0xd8] sm:$0xff]
        %v336 = vld [vmem:[%s285 + $0xe0] sm:$0xff]
        %v337 = vld [vmem:[%s285 + $0xe8] sm:$0x3]
        %v338 = vld [vmem:[%s285 + $0xf0] sm:$0xff]
        %v339 = vld [vmem:[%s285 + $0xf8] sm:$0xff]
        %v340 = vld [vmem:[%s285 + $0x100] sm:$0x3]
        %v341 = vld [vmem:[%s285 + $0x108] sm:$0xff]
        %v342 = vld [vmem:[%s285 + $0x110] sm:$0xff]
        %v343 = vld [vmem:[%s285 + $0x118] sm:$0x3]
        %v344 = vld [vmem:[%s285 + $0x120] sm:$0xff]
        %v345 = vld [vmem:[%s285 + $0x128] sm:$0xff]
        %v346 = vld [vmem:[%s285 + $0x130] sm:$0x3]
        %v347 = vld [vmem:[%s285 + $0x138] sm:$0xff]
        %v348 = vld [vmem:[%s285 + $0x140] sm:$0xff]
        %v349 = vld [vmem:[%s285 + $0x148] sm:$0x3]
        %v350 = vld [vmem:[%s285 + $0x150] sm:$0xff]
        %v351 = vld [vmem:[%s285 + $0x158] sm:$0xff]
        %v352 = vld [vmem:[%s285 + $0x160] sm:$0x3]
        %v353 = vld [vmem:[%s285 + $0x168] sm:$0xff]
        %v354 = vld [vmem:[%s285 + $0x170] sm:$0xff]
        %v355 = vld [vmem:[%s285 + $0x178] sm:$0x3]
        %v356 = vld [vmem:[%s303] sm:$0xff]
        %v357 = vld [vmem:[%s303 + $0x8] sm:$0xff]
        %v358 = vld [vmem:[%s303 + $0x10] sm:$0x3]
        %v359 = vld [vmem:[%s303 + $0x18] sm:$0xff]
        %v360 = vld [vmem:[%s303 + $0x20] sm:$0xff]
        %v361 = vld [vmem:[%s303 + $0x28] sm:$0x3]
        %v362 = vld [vmem:[%s3] sm:$0x1]
        %vm411 = vcmask 1046528
        %v412 = vrot.slane %v308, 1
        %v413 = vrot.slane %v309, 1
        %v414 = vsel %vm411, %v412, %v413
        %v415 = vrot.slane %v310, 1
        %v416 = vsel %vm411, %v413, %v415
        %v417 = vrot.slane %v311, 1
        %v418 = vrot.slane %v312, 1
        %v419 = vsel %vm411, %v417, %v418
        %v420 = vrot.slane %v313, 1
        %v421 = vsel %vm411, %v418, %v420
        %v422 = vrot.slane %v314, 1
        %v423 = vrot.slane %v315, 1
        %v424 = vsel %vm411, %v422, %v423
        %v425 = vrot.slane %v316, 1
        %v426 = vsel %vm411, %v423, %v425
        %v427 = vrot.slane %v317, 1
        %v428 = vrot.slane %v318, 1
        %v429 = vsel %vm411, %v427, %v428
        %v430 = vrot.slane %v319, 1
        %v431 = vsel %vm411, %v428, %v430
        %v432 = vrot.slane %v320, 1
        %v433 = vrot.slane %v321, 1
        %v434 = vsel %vm411, %v432, %v433
        %v435 = vrot.slane %v322, 1
        %v436 = vsel %vm411, %v433, %v435
        %v437 = vrot.slane %v323, 1
        %v438 = vrot.slane %v324, 1
        %v439 = vsel %vm411, %v437, %v438
        %v440 = vrot.slane %v325, 1
        %v441 = vsel %vm411, %v438, %v440
        %v442 = vrot.slane %v326, 1
        %v443 = vrot.slane %v327, 1
        %v444 = vsel %vm411, %v442, %v443
        %v445 = vrot.slane %v328, 1
        %v446 = vsel %vm411, %v443, %v445
        %v447 = vrot.slane %v329, 1
        %v448 = vrot.slane %v330, 1
        %v449 = vsel %vm411, %v447, %v448
        %v450 = vrot.slane %v331, 1
        %v451 = vsel %vm411, %v448, %v450
        %v452 = vrot.slane %v332, 1
        %v453 = vrot.slane %v333, 1
        %v454 = vsel %vm411, %v452, %v453
        %v455 = vrot.slane %v334, 1
        %v456 = vsel %vm411, %v453, %v455
        %v457 = vrot.slane %v335, 1
        %v458 = vrot.slane %v336, 1
        %v459 = vsel %vm411, %v457, %v458
        %v460 = vrot.slane %v337, 1
        %v461 = vsel %vm411, %v458, %v460
        %v462 = vrot.slane %v338, 1
        %v463 = vrot.slane %v339, 1
        %v464 = vsel %vm411, %v462, %v463
        %v465 = vrot.slane %v340, 1
        %v466 = vsel %vm411, %v463, %v465
        %v467 = vrot.slane %v341, 1
        %v468 = vrot.slane %v342, 1
        %v469 = vsel %vm411, %v467, %v468
        %v470 = vrot.slane %v343, 1
        %v471 = vsel %vm411, %v468, %v470
        %v472 = vrot.slane %v344, 1
        %v473 = vrot.slane %v345, 1
        %v474 = vsel %vm411, %v472, %v473
        %v475 = vrot.slane %v346, 1
        %v476 = vsel %vm411, %v473, %v475
        %v477 = vrot.slane %v347, 1
        %v478 = vrot.slane %v348, 1
        %v479 = vsel %vm411, %v477, %v478
        %v480 = vrot.slane %v349, 1
        %v481 = vsel %vm411, %v478, %v480
        %v482 = vrot.slane %v350, 1
        %v483 = vrot.slane %v351, 1
        %v484 = vsel %vm411, %v482, %v483
        %v485 = vrot.slane %v352, 1
        %v486 = vsel %vm411, %v483, %v485
        %v487 = vrot.slane %v353, 1
        %v488 = vrot.slane %v354, 1
        %v489 = vsel %vm411, %v487, %v488
        %v490 = vrot.slane %v355, 1
        %v491 = vsel %vm411, %v488, %v490
        %492 = vrot.lane.b32.xlu0 %v414, 4
        %v493 = vpop.permute.xlu0 %492
        %494 = vrot.lane.b32.xlu0 %v416, 4
        %v495 = vpop.permute.xlu0 %494
        %496 = vrot.lane.b32.xlu0 %v419, 4
        %v497 = vpop.permute.xlu0 %496
        %498 = vrot.lane.b32.xlu0 %v421, 4
        %v499 = vpop.permute.xlu0 %498
        %500 = vrot.lane.b32.xlu0 %v424, 4
        %v501 = vpop.permute.xlu0 %500
        %502 = vrot.lane.b32.xlu0 %v426, 4
        %v503 = vpop.permute.xlu0 %502
        %504 = vrot.lane.b32.xlu0 %v429, 4
        %v505 = vpop.permute.xlu0 %504
        %506 = vrot.lane.b32.xlu0 %v431, 4
        %v507 = vpop.permute.xlu0 %506
        %508 = vrot.lane.b32.xlu0 %v434, 4
        %v509 = vpop.permute.xlu0 %508
        %510 = vrot.lane.b32.xlu0 %v436, 4
        %v511 = vpop.permute.xlu0 %510
        %512 = vrot.lane.b32.xlu0 %v439, 4
        %v513 = vpop.permute.xlu0 %512
        %514 = vrot.lane.b32.xlu0 %v441, 4
        %v515 = vpop.permute.xlu0 %514
        %516 = vrot.lane.b32.xlu0 %v444, 4
        %v517 = vpop.permute.xlu0 %516
        %518 = vrot.lane.b32.xlu0 %v446, 4
        %v519 = vpop.permute.xlu0 %518
        %520 = vrot.lane.b32.xlu0 %v449, 4
        %v521 = vpop.permute.xlu0 %520
        %522 = vrot.lane.b32.xlu0 %v451, 4
        %v523 = vpop.permute.xlu0 %522
        %524 = vrot.lane.b32.xlu0 %v454, 4
        %v525 = vpop.permute.xlu0 %524
        %526 = vrot.lane.b32.xlu0 %v456, 4
        %v527 = vpop.permute.xlu0 %526
        %528 = vrot.lane.b32.xlu0 %v459, 4
        %v529 = vpop.permute.xlu0 %528
        %530 = vrot.lane.b32.xlu0 %v461, 4
        %v531 = vpop.permute.xlu0 %530
        %532 = vrot.lane.b32.xlu0 %v464, 4
        %v533 = vpop.permute.xlu0 %532
        %534 = vrot.lane.b32.xlu0 %v466, 4
        %v535 = vpop.permute.xlu0 %534
        %536 = vrot.lane.b32.xlu0 %v469, 4
        %v537 = vpop.permute.xlu0 %536
        %538 = vrot.lane.b32.xlu0 %v471, 4
        %v539 = vpop.permute.xlu0 %538
        %540 = vrot.lane.b32.xlu0 %v474, 4
        %v541 = vpop.permute.xlu0 %540
        %542 = vrot.lane.b32.xlu0 %v476, 4
        %v543 = vpop.permute.xlu0 %542
        %544 = vrot.lane.b32.xlu0 %v479, 4
        %v545 = vpop.permute.xlu0 %544
        %546 = vrot.lane.b32.xlu0 %v481, 4
        %v547 = vpop.permute.xlu0 %546
        %548 = vrot.lane.b32.xlu0 %v484, 4
        %v549 = vpop.permute.xlu0 %548
        %550 = vrot.lane.b32.xlu0 %v486, 4
        %v551 = vpop.permute.xlu0 %550
        %552 = vrot.lane.b32.xlu0 %v489, 4
        %v553 = vpop.permute.xlu0 %552
        %554 = vrot.lane.b32.xlu0 %v491, 4
        %v555 = vpop.permute.xlu0 %554
        %vm588 = vcmask 1045504
        %v589 = vrot.slane %v308, 2
        %v590 = vrot.slane %v309, 2
        %v591 = vsel %vm588, %v589, %v590
        %v592 = vrot.slane %v310, 2
        %v593 = vsel %vm588, %v590, %v592
        %v594 = vrot.slane %v311, 2
        %v595 = vrot.slane %v312, 2
        %v596 = vsel %vm588, %v594, %v595
        %v597 = vrot.slane %v313, 2
        %v598 = vsel %vm588, %v595, %v597
        %v599 = vrot.slane %v314, 2
        %v600 = vrot.slane %v315, 2
        %v601 = vsel %vm588, %v599, %v600
        %v602 = vrot.slane %v316, 2
        %v603 = vsel %vm588, %v600, %v602
        %v604 = vrot.slane %v317, 2
        %v605 = vrot.slane %v318, 2
        %v606 = vsel %vm588, %v604, %v605
        %v607 = vrot.slane %v319, 2
        %v608 = vsel %vm588, %v605, %v607
        %v609 = vrot.slane %v320, 2
        %v610 = vrot.slane %v321, 2
        %v611 = vsel %vm588, %v609, %v610
        %v612 = vrot.slane %v322, 2
        %v613 = vsel %vm588, %v610, %v612
        %v614 = vrot.slane %v323, 2
        %v615 = vrot.slane %v324, 2
        %v616 = vsel %vm588, %v614, %v615
        %v617 = vrot.slane %v325, 2
        %v618 = vsel %vm588, %v615, %v617
        %v619 = vrot.slane %v326, 2
        %v620 = vrot.slane %v327, 2
        %v621 = vsel %vm588, %v619, %v620
        %v622 = vrot.slane %v328, 2
        %v623 = vsel %vm588, %v620, %v622
        %v624 = vrot.slane %v329, 2
        %v625 = vrot.slane %v330, 2
        %v626 = vsel %vm588, %v624, %v625
        %v627 = vrot.slane %v331, 2
        %v628 = vsel %vm588, %v625, %v627
        %v629 = vrot.slane %v332, 2
        %v630 = vrot.slane %v333, 2
        %v631 = vsel %vm588, %v629, %v630
        %v632 = vrot.slane %v334, 2
        %v633 = vsel %vm588, %v630, %v632
        %v634 = vrot.slane %v335, 2
        %v635 = vrot.slane %v336, 2
        %v636 = vsel %vm588, %v634, %v635
        %v637 = vrot.slane %v337, 2
        %v638 = vsel %vm588, %v635, %v637
        %v639 = vrot.slane %v338, 2
        %v640 = vrot.slane %v339, 2
        %v641 = vsel %vm588, %v639, %v640
        %v642 = vrot.slane %v340, 2
        %v643 = vsel %vm588, %v640, %v642
        %v644 = vrot.slane %v341, 2
        %v645 = vrot.slane %v342, 2
        %v646 = vsel %vm588, %v644, %v645
        %v647 = vrot.slane %v343, 2
        %v648 = vsel %vm588, %v645, %v647
        %v649 = vrot.slane %v344, 2
        %v650 = vrot.slane %v345, 2
        %v651 = vsel %vm588, %v649, %v650
        %v652 = vrot.slane %v346, 2
        %v653 = vsel %vm588, %v650, %v652
        %v654 = vrot.slane %v347, 2
        %v655 = vrot.slane %v348, 2
        %v656 = vsel %vm588, %v654, %v655
        %v657 = vrot.slane %v349, 2
        %v658 = vsel %vm588, %v655, %v657
        %v659 = vrot.slane %v350, 2
        %v660 = vrot.slane %v351, 2
        %v661 = vsel %vm588, %v659, %v660
        %v662 = vrot.slane %v352, 2
        %v663 = vsel %vm588, %v660, %v662
        %v664 = vrot.slane %v353, 2
        %v665 = vrot.slane %v354, 2
        %v666 = vsel %vm588, %v664, %v665
        %v667 = vrot.slane %v355, 2
        %v668 = vsel %vm588, %v665, %v667
        %669 = vrot.lane.b32.xlu0 %v591, 8
        %v670 = vpop.permute.xlu0 %669
        %671 = vrot.lane.b32.xlu0 %v593, 8
        %v672 = vpop.permute.xlu0 %671
        %673 = vrot.lane.b32.xlu0 %v596, 8
        %v674 = vpop.permute.xlu0 %673
        %675 = vrot.lane.b32.xlu0 %v598, 8
        %v676 = vpop.permute.xlu0 %675
        %677 = vrot.lane.b32.xlu0 %v601, 8
        %v678 = vpop.permute.xlu0 %677
        %679 = vrot.lane.b32.xlu0 %v603, 8
        %v680 = vpop.permute.xlu0 %679
        %681 = vrot.lane.b32.xlu0 %v606, 8
        %v682 = vpop.permute.xlu0 %681
        %683 = vrot.lane.b32.xlu0 %v608, 8
        %v684 = vpop.permute.xlu0 %683
        %685 = vrot.lane.b32.xlu0 %v611, 8
        %v686 = vpop.permute.xlu0 %685
        %687 = vrot.lane.b32.xlu0 %v613, 8
        %v688 = vpop.permute.xlu0 %687
        %689 = vrot.lane.b32.xlu0 %v616, 8
        %v690 = vpop.permute.xlu0 %689
        %691 = vrot.lane.b32.xlu0 %v618, 8
        %v692 = vpop.permute.xlu0 %691
        %693 = vrot.lane.b32.xlu0 %v621, 8
        %v694 = vpop.permute.xlu0 %693
        %695 = vrot.lane.b32.xlu0 %v623, 8
        %v696 = vpop.permute.xlu0 %695
        %697 = vrot.lane.b32.xlu0 %v626, 8
        %v698 = vpop.permute.xlu0 %697
        %699 = vrot.lane.b32.xlu0 %v628, 8
        %v700 = vpop.permute.xlu0 %699
        %701 = vrot.lane.b32.xlu0 %v631, 8
        %v702 = vpop.permute.xlu0 %701
        %703 = vrot.lane.b32.xlu0 %v633, 8
        %v704 = vpop.permute.xlu0 %703
        %705 = vrot.lane.b32.xlu0 %v636, 8
        %v706 = vpop.permute.xlu0 %705
        %707 = vrot.lane.b32.xlu0 %v638, 8
        %v708 = vpop.permute.xlu0 %707
        %709 = vrot.lane.b32.xlu0 %v641, 8
        %v710 = vpop.permute.xlu0 %709
        %711 = vrot.lane.b32.xlu0 %v643, 8
        %v712 = vpop.permute.xlu0 %711
        %713 = vrot.lane.b32.xlu0 %v646, 8
        %v714 = vpop.permute.xlu0 %713
        %715 = vrot.lane.b32.xlu0 %v648, 8
        %v716 = vpop.permute.xlu0 %715
        %717 = vrot.lane.b32.xlu0 %v651, 8
        %v718 = vpop.permute.xlu0 %717
        %719 = vrot.lane.b32.xlu0 %v653, 8
        %v720 = vpop.permute.xlu0 %719
        %721 = vrot.lane.b32.xlu0 %v656, 8
        %v722 = vpop.permute.xlu0 %721
        %723 = vrot.lane.b32.xlu0 %v658, 8
        %v724 = vpop.permute.xlu0 %723
        %725 = vrot.lane.b32.xlu0 %v661, 8
        %v726 = vpop.permute.xlu0 %725
        %727 = vrot.lane.b32.xlu0 %v663, 8
        %v728 = vpop.permute.xlu0 %727
        %729 = vrot.lane.b32.xlu0 %v666, 8
        %v730 = vpop.permute.xlu0 %729
        %731 = vrot.lane.b32.xlu0 %v668, 8
        %v732 = vpop.permute.xlu0 %731
        %767 = vrot.lane.b32.xlu0 %v311, 12
        %v768 = vpop.permute.xlu0 %767
        %769 = vrot.lane.b32.xlu0 %v312, 12
        %v770 = vpop.permute.xlu0 %769
        %771 = vrot.lane.b32.xlu0 %v314, 12
        %v772 = vpop.permute.xlu0 %771
        %773 = vrot.lane.b32.xlu0 %v315, 12
        %v774 = vpop.permute.xlu0 %773
        %775 = vrot.lane.b32.xlu0 %v317, 12
        %v776 = vpop.permute.xlu0 %775
        %777 = vrot.lane.b32.xlu0 %v318, 12
        %v778 = vpop.permute.xlu0 %777
        %779 = vrot.lane.b32.xlu0 %v320, 12
        %v780 = vpop.permute.xlu0 %779
        %781 = vrot.lane.b32.xlu0 %v321, 12
        %v782 = vpop.permute.xlu0 %781
        %783 = vrot.lane.b32.xlu0 %v323, 12
        %v784 = vpop.permute.xlu0 %783
        %785 = vrot.lane.b32.xlu0 %v324, 12
        %v786 = vpop.permute.xlu0 %785
        %787 = vrot.lane.b32.xlu0 %v326, 12
        %v788 = vpop.permute.xlu0 %787
        %789 = vrot.lane.b32.xlu0 %v327, 12
        %v790 = vpop.permute.xlu0 %789
        %791 = vrot.lane.b32.xlu0 %v329, 12
        %v792 = vpop.permute.xlu0 %791
        %793 = vrot.lane.b32.xlu0 %v330, 12
        %v794 = vpop.permute.xlu0 %793
        %795 = vrot.lane.b32.xlu0 %v332, 12
        %v796 = vpop.permute.xlu0 %795
        %797 = vrot.lane.b32.xlu0 %v333, 12
        %v798 = vpop.permute.xlu0 %797
        %799 = vrot.lane.b32.xlu0 %v335, 12
        %v800 = vpop.permute.xlu0 %799
        %801 = vrot.lane.b32.xlu0 %v336, 12
        %v802 = vpop.permute.xlu0 %801
        %803 = vrot.lane.b32.xlu0 %v338, 12
        %v804 = vpop.permute.xlu0 %803
        %805 = vrot.lane.b32.xlu0 %v339, 12
        %v806 = vpop.permute.xlu0 %805
        %807 = vrot.lane.b32.xlu0 %v341, 12
        %v808 = vpop.permute.xlu0 %807
        %809 = vrot.lane.b32.xlu0 %v342, 12
        %v810 = vpop.permute.xlu0 %809
        %811 = vrot.lane.b32.xlu0 %v344, 12
        %v812 = vpop.permute.xlu0 %811
        %813 = vrot.lane.b32.xlu0 %v345, 12
        %v814 = vpop.permute.xlu0 %813
        %815 = vrot.lane.b32.xlu0 %v347, 12
        %v816 = vpop.permute.xlu0 %815
        %817 = vrot.lane.b32.xlu0 %v348, 12
        %v818 = vpop.permute.xlu0 %817
        %819 = vrot.lane.b32.xlu0 %v350, 12
        %v820 = vpop.permute.xlu0 %819
        %821 = vrot.lane.b32.xlu0 %v351, 12
        %v822 = vpop.permute.xlu0 %821
        %823 = vrot.lane.b32.xlu0 %v353, 12
        %v824 = vpop.permute.xlu0 %823
        %825 = vrot.lane.b32.xlu0 %v354, 12
        %v826 = vpop.permute.xlu0 %825
        %827 = vrot.lane.b32.xlu0 %v356, 12
        %v828 = vpop.permute.xlu0 %827
        %829 = vrot.lane.b32.xlu0 %v357, 12
        %v830 = vpop.permute.xlu0 %829
        %v864 = vrot.slane %v356, 1
        %v865 = vrot.slane %v357, 1
        %v866 = vsel %vm411, %v864, %v865
        %v867 = vrot.slane %v358, 1
        %v868 = vsel %vm411, %v865, %v867
        %869 = vrot.lane.b32.xlu0 %v419, 16
        %v870 = vpop.permute.xlu0 %869
        %871 = vrot.lane.b32.xlu0 %v421, 16
        %v872 = vpop.permute.xlu0 %871
        %873 = vrot.lane.b32.xlu0 %v424, 16
        %v874 = vpop.permute.xlu0 %873
        %875 = vrot.lane.b32.xlu0 %v426, 16
        %v876 = vpop.permute.xlu0 %875
        %877 = vrot.lane.b32.xlu0 %v429, 16
        %v878 = vpop.permute.xlu0 %877
        %879 = vrot.lane.b32.xlu0 %v431, 16
        %v880 = vpop.permute.xlu0 %879
        %881 = vrot.lane.b32.xlu0 %v434, 16
        %v882 = vpop.permute.xlu0 %881
        %883 = vrot.lane.b32.xlu0 %v436, 16
        %v884 = vpop.permute.xlu0 %883
        %885 = vrot.lane.b32.xlu0 %v439, 16
        %v886 = vpop.permute.xlu0 %885
        %887 = vrot.lane.b32.xlu0 %v441, 16
        %v888 = vpop.permute.xlu0 %887
        %889 = vrot.lane.b32.xlu0 %v444, 16
        %v890 = vpop.permute.xlu0 %889
        %891 = vrot.lane.b32.xlu0 %v446, 16
        %v892 = vpop.permute.xlu0 %891
        %893 = vrot.lane.b32.xlu0 %v449, 16
        %v894 = vpop.permute.xlu0 %893
        %895 = vrot.lane.b32.xlu0 %v451, 16
        %v896 = vpop.permute.xlu0 %895
        %897 = vrot.lane.b32.xlu0 %v454, 16
        %v898 = vpop.permute.xlu0 %897
        %899 = vrot.lane.b32.xlu0 %v456, 16
        %v900 = vpop.permute.xlu0 %899
        %901 = vrot.lane.b32.xlu0 %v459, 16
        %v902 = vpop.permute.xlu0 %901
        %903 = vrot.lane.b32.xlu0 %v461, 16
        %v904 = vpop.permute.xlu0 %903
        %905 = vrot.lane.b32.xlu0 %v464, 16
        %v906 = vpop.permute.xlu0 %905
        %907 = vrot.lane.b32.xlu0 %v466, 16
        %v908 = vpop.permute.xlu0 %907
        %909 = vrot.lane.b32.xlu0 %v469, 16
        %v910 = vpop.permute.xlu0 %909
        %911 = vrot.lane.b32.xlu0 %v471, 16
        %v912 = vpop.permute.xlu0 %911
        %913 = vrot.lane.b32.xlu0 %v474, 16
        %v914 = vpop.permute.xlu0 %913
        %915 = vrot.lane.b32.xlu0 %v476, 16
        %v916 = vpop.permute.xlu0 %915
        %917 = vrot.lane.b32.xlu0 %v479, 16
        %v918 = vpop.permute.xlu0 %917
        %919 = vrot.lane.b32.xlu0 %v481, 16
        %v920 = vpop.permute.xlu0 %919
        %921 = vrot.lane.b32.xlu0 %v484, 16
        %v922 = vpop.permute.xlu0 %921
        %923 = vrot.lane.b32.xlu0 %v486, 16
        %v924 = vpop.permute.xlu0 %923
        %925 = vrot.lane.b32.xlu0 %v489, 16
        %v926 = vpop.permute.xlu0 %925
        %927 = vrot.lane.b32.xlu0 %v491, 16
        %v928 = vpop.permute.xlu0 %927
        %929 = vrot.lane.b32.xlu0 %v866, 16
        %v930 = vpop.permute.xlu0 %929
        %931 = vrot.lane.b32.xlu0 %v868, 16
        %v932 = vpop.permute.xlu0 %931
        %v965 = vrot.slane %v356, 2
        %v966 = vrot.slane %v357, 2
        %v967 = vsel %vm588, %v965, %v966
        %v968 = vrot.slane %v358, 2
        %v969 = vsel %vm588, %v966, %v968
        %970 = vrot.lane.b32.xlu0 %v596, 20
        %v971 = vpop.permute.xlu0 %970
        %972 = vrot.lane.b32.xlu0 %v598, 20
        %v973 = vpop.permute.xlu0 %972
        %974 = vrot.lane.b32.xlu0 %v601, 20
        %v975 = vpop.permute.xlu0 %974
        %976 = vrot.lane.b32.xlu0 %v603, 20
        %v977 = vpop.permute.xlu0 %976
        %978 = vrot.lane.b32.xlu0 %v606, 20
        %v979 = vpop.permute.xlu0 %978
        %980 = vrot.lane.b32.xlu0 %v608, 20
        %v981 = vpop.permute.xlu0 %980
        %982 = vrot.lane.b32.xlu0 %v611, 20
        %v983 = vpop.permute.xlu0 %982
        %984 = vrot.lane.b32.xlu0 %v613, 20
        %v985 = vpop.permute.xlu0 %984
        %986 = vrot.lane.b32.xlu0 %v616, 20
        %v987 = vpop.permute.xlu0 %986
        %988 = vrot.lane.b32.xlu0 %v618, 20
        %v989 = vpop.permute.xlu0 %988
        %990 = vrot.lane.b32.xlu0 %v621, 20
        %v991 = vpop.permute.xlu0 %990
        %992 = vrot.lane.b32.xlu0 %v623, 20
        %v993 = vpop.permute.xlu0 %992
        %994 = vrot.lane.b32.xlu0 %v626, 20
        %v995 = vpop.permute.xlu0 %994
        %996 = vrot.lane.b32.xlu0 %v628, 20
        %v997 = vpop.permute.xlu0 %996
        %998 = vrot.lane.b32.xlu0 %v631, 20
        %v999 = vpop.permute.xlu0 %998
        %1000 = vrot.lane.b32.xlu0 %v633, 20
        %v1001 = vpop.permute.xlu0 %1000
        %1002 = vrot.lane.b32.xlu0 %v636, 20
        %v1003 = vpop.permute.xlu0 %1002
        %1004 = vrot.lane.b32.xlu0 %v638, 20
        %v1005 = vpop.permute.xlu0 %1004
        %1006 = vrot.lane.b32.xlu0 %v641, 20
        %v1007 = vpop.permute.xlu0 %1006
        %1008 = vrot.lane.b32.xlu0 %v643, 20
        %v1009 = vpop.permute.xlu0 %1008
        %1010 = vrot.lane.b32.xlu0 %v646, 20
        %v1011 = vpop.permute.xlu0 %1010
        %1012 = vrot.lane.b32.xlu0 %v648, 20
        %v1013 = vpop.permute.xlu0 %1012
        %1014 = vrot.lane.b32.xlu0 %v651, 20
        %v1015 = vpop.permute.xlu0 %1014
        %1016 = vrot.lane.b32.xlu0 %v653, 20
        %v1017 = vpop.permute.xlu0 %1016
        %1018 = vrot.lane.b32.xlu0 %v656, 20
        %v1019 = vpop.permute.xlu0 %1018
        %1020 = vrot.lane.b32.xlu0 %v658, 20
        %v1021 = vpop.permute.xlu0 %1020
        %1022 = vrot.lane.b32.xlu0 %v661, 20
        %v1023 = vpop.permute.xlu0 %1022
        %1024 = vrot.lane.b32.xlu0 %v663, 20
        %v1025 = vpop.permute.xlu0 %1024
        %1026 = vrot.lane.b32.xlu0 %v666, 20
        %v1027 = vpop.permute.xlu0 %1026
        %1028 = vrot.lane.b32.xlu0 %v668, 20
        %v1029 = vpop.permute.xlu0 %1028
        %1030 = vrot.lane.b32.xlu0 %v967, 20
        %v1031 = vpop.permute.xlu0 %1030
        %1032 = vrot.lane.b32.xlu0 %v969, 20
        %v1033 = vpop.permute.xlu0 %1032
        %1068 = vrot.lane.b32.xlu0 %v314, 24
        %v1069 = vpop.permute.xlu0 %1068
        %1070 = vrot.lane.b32.xlu0 %v315, 24
        %v1071 = vpop.permute.xlu0 %1070
        %1072 = vrot.lane.b32.xlu0 %v317, 24
        %v1073 = vpop.permute.xlu0 %1072
        %1074 = vrot.lane.b32.xlu0 %v318, 24
        %v1075 = vpop.permute.xlu0 %1074
        %1076 = vrot.lane.b32.xlu0 %v320, 24
        %v1077 = vpop.permute.xlu0 %1076
        %1078 = vrot.lane.b32.xlu0 %v321, 24
        %v1079 = vpop.permute.xlu0 %1078
        %1080 = vrot.lane.b32.xlu0 %v323, 24
        %v1081 = vpop.permute.xlu0 %1080
        %1082 = vrot.lane.b32.xlu0 %v324, 24
        %v1083 = vpop.permute.xlu0 %1082
        %1084 = vrot.lane.b32.xlu0 %v326, 24
        %v1085 = vpop.permute.xlu0 %1084
        %1086 = vrot.lane.b32.xlu0 %v327, 24
        %v1087 = vpop.permute.xlu0 %1086
        %1088 = vrot.lane.b32.xlu0 %v329, 24
        %v1089 = vpop.permute.xlu0 %1088
        %1090 = vrot.lane.b32.xlu0 %v330, 24
        %v1091 = vpop.permute.xlu0 %1090
        %1092 = vrot.lane.b32.xlu0 %v332, 24
        %v1093 = vpop.permute.xlu0 %1092
        %1094 = vrot.lane.b32.xlu0 %v333, 24
        %v1095 = vpop.permute.xlu0 %1094
        %1096 = vrot.lane.b32.xlu0 %v335, 24
        %v1097 = vpop.permute.xlu0 %1096
        %1098 = vrot.lane.b32.xlu0 %v336, 24
        %v1099 = vpop.permute.xlu0 %1098
        %1100 = vrot.lane.b32.xlu0 %v338, 24
        %v1101 = vpop.permute.xlu0 %1100
        %1102 = vrot.lane.b32.xlu0 %v339, 24
        %v1103 = vpop.permute.xlu0 %1102
        %1104 = vrot.lane.b32.xlu0 %v341, 24
        %v1105 = vpop.permute.xlu0 %1104
        %1106 = vrot.lane.b32.xlu0 %v342, 24
        %v1107 = vpop.permute.xlu0 %1106
        %1108 = vrot.lane.b32.xlu0 %v344, 24
        %v1109 = vpop.permute.xlu0 %1108
        %1110 = vrot.lane.b32.xlu0 %v345, 24
        %v1111 = vpop.permute.xlu0 %1110
        %1112 = vrot.lane.b32.xlu0 %v347, 24
        %v1113 = vpop.permute.xlu0 %1112
        %1114 = vrot.lane.b32.xlu0 %v348, 24
        %v1115 = vpop.permute.xlu0 %1114
        %1116 = vrot.lane.b32.xlu0 %v350, 24
        %v1117 = vpop.permute.xlu0 %1116
        %1118 = vrot.lane.b32.xlu0 %v351, 24
        %v1119 = vpop.permute.xlu0 %1118
        %1120 = vrot.lane.b32.xlu0 %v353, 24
        %v1121 = vpop.permute.xlu0 %1120
        %1122 = vrot.lane.b32.xlu0 %v354, 24
        %v1123 = vpop.permute.xlu0 %1122
        %1124 = vrot.lane.b32.xlu0 %v356, 24
        %v1125 = vpop.permute.xlu0 %1124
        %1126 = vrot.lane.b32.xlu0 %v357, 24
        %v1127 = vpop.permute.xlu0 %1126
        %1128 = vrot.lane.b32.xlu0 %v359, 24
        %v1129 = vpop.permute.xlu0 %1128
        %1130 = vrot.lane.b32.xlu0 %v360, 24
        %v1131 = vpop.permute.xlu0 %1130
        %v1165 = vrot.slane %v359, 1
        %v1166 = vrot.slane %v360, 1
        %v1167 = vsel %vm411, %v1165, %v1166
        %v1168 = vrot.slane %v361, 1
        %v1169 = vsel %vm411, %v1166, %v1168
        %1170 = vrot.lane.b32.xlu0 %v424, 28
        %v1171 = vpop.permute.xlu0 %1170
        %1172 = vrot.lane.b32.xlu0 %v426, 28
        %v1173 = vpop.permute.xlu0 %1172
        %1174 = vrot.lane.b32.xlu0 %v429, 28
        %v1175 = vpop.permute.xlu0 %1174
        %1176 = vrot.lane.b32.xlu0 %v431, 28
        %v1177 = vpop.permute.xlu0 %1176
        %1178 = vrot.lane.b32.xlu0 %v434, 28
        %v1179 = vpop.permute.xlu0 %1178
        %1180 = vrot.lane.b32.xlu0 %v436, 28
        %v1181 = vpop.permute.xlu0 %1180
        %1182 = vrot.lane.b32.xlu0 %v439, 28
        %v1183 = vpop.permute.xlu0 %1182
        %1184 = vrot.lane.b32.xlu0 %v441, 28
        %v1185 = vpop.permute.xlu0 %1184
        %1186 = vrot.lane.b32.xlu0 %v444, 28
        %v1187 = vpop.permute.xlu0 %1186
        %1188 = vrot.lane.b32.xlu0 %v446, 28
        %v1189 = vpop.permute.xlu0 %1188
        %1190 = vrot.lane.b32.xlu0 %v449, 28
        %v1191 = vpop.permute.xlu0 %1190
        %1192 = vrot.lane.b32.xlu0 %v451, 28
        %v1193 = vpop.permute.xlu0 %1192
        %1194 = vrot.lane.b32.xlu0 %v454, 28
        %v1195 = vpop.permute.xlu0 %1194
        %1196 = vrot.lane.b32.xlu0 %v456, 28
        %v1197 = vpop.permute.xlu0 %1196
        %1198 = vrot.lane.b32.xlu0 %v459, 28
        %v1199 = vpop.permute.xlu0 %1198
        %1200 = vrot.lane.b32.xlu0 %v461, 28
        %v1201 = vpop.permute.xlu0 %1200
        %1202 = vrot.lane.b32.xlu0 %v464, 28
        %v1203 = vpop.permute.xlu0 %1202
        %1204 = vrot.lane.b32.xlu0 %v466, 28
        %v1205 = vpop.permute.xlu0 %1204
        %1206 = vrot.lane.b32.xlu0 %v469, 28
        %v1207 = vpop.permute.xlu0 %1206
        %1208 = vrot.lane.b32.xlu0 %v471, 28
        %v1209 = vpop.permute.xlu0 %1208
        %1210 = vrot.lane.b32.xlu0 %v474, 28
        %v1211 = vpop.permute.xlu0 %1210
        %1212 = vrot.lane.b32.xlu0 %v476, 28
        %v1213 = vpop.permute.xlu0 %1212
        %1214 = vrot.lane.b32.xlu0 %v479, 28
        %v1215 = vpop.permute.xlu0 %1214
        %1216 = vrot.lane.b32.xlu0 %v481, 28
        %v1217 = vpop.permute.xlu0 %1216
        %1218 = vrot.lane.b32.xlu0 %v484, 28
        %v1219 = vpop.permute.xlu0 %1218
        %1220 = vrot.lane.b32.xlu0 %v486, 28
        %v1221 = vpop.permute.xlu0 %1220
        %1222 = vrot.lane.b32.xlu0 %v489, 28
        %v1223 = vpop.permute.xlu0 %1222
        %1224 = vrot.lane.b32.xlu0 %v491, 28
        %v1225 = vpop.permute.xlu0 %1224
        %1226 = vrot.lane.b32.xlu0 %v866, 28
        %v1227 = vpop.permute.xlu0 %1226
        %1228 = vrot.lane.b32.xlu0 %v868, 28
        %v1229 = vpop.permute.xlu0 %1228
        %1230 = vrot.lane.b32.xlu0 %v1167, 28
        %v1231 = vpop.permute.xlu0 %1230
        %1232 = vrot.lane.b32.xlu0 %v1169, 28
        %v1233 = vpop.permute.xlu0 %1232
        %v1266 = vrot.slane %v359, 2
        %v1267 = vrot.slane %v360, 2
        %v1268 = vsel %vm588, %v1266, %v1267
        %v1269 = vrot.slane %v361, 2
        %v1270 = vsel %vm588, %v1267, %v1269
        %1271 = vrot.lane.b32.xlu0 %v601, 32
        %v1272 = vpop.permute.xlu0 %1271
        %1273 = vrot.lane.b32.xlu0 %v603, 32
        %v1274 = vpop.permute.xlu0 %1273
        %1275 = vrot.lane.b32.xlu0 %v606, 32
        %v1276 = vpop.permute.xlu0 %1275
        %1277 = vrot.lane.b32.xlu0 %v608, 32
        %v1278 = vpop.permute.xlu0 %1277
        %1279 = vrot.lane.b32.xlu0 %v611, 32
        %v1280 = vpop.permute.xlu0 %1279
        %1281 = vrot.lane.b32.xlu0 %v613, 32
        %v1282 = vpop.permute.xlu0 %1281
        %1283 = vrot.lane.b32.xlu0 %v616, 32
        %v1284 = vpop.permute.xlu0 %1283
        %1285 = vrot.lane.b32.xlu0 %v618, 32
        %v1286 = vpop.permute.xlu0 %1285
        %1287 = vrot.lane.b32.xlu0 %v621, 32
        %v1288 = vpop.permute.xlu0 %1287
        %1289 = vrot.lane.b32.xlu0 %v623, 32
        %v1290 = vpop.permute.xlu0 %1289
        %1291 = vrot.lane.b32.xlu0 %v626, 32
        %v1292 = vpop.permute.xlu0 %1291
        %1293 = vrot.lane.b32.xlu0 %v628, 32
        %v1294 = vpop.permute.xlu0 %1293
        %1295 = vrot.lane.b32.xlu0 %v631, 32
        %v1296 = vpop.permute.xlu0 %1295
        %1297 = vrot.lane.b32.xlu0 %v633, 32
        %v1298 = vpop.permute.xlu0 %1297
        %1299 = vrot.lane.b32.xlu0 %v636, 32
        %v1300 = vpop.permute.xlu0 %1299
        %1301 = vrot.lane.b32.xlu0 %v638, 32
        %v1302 = vpop.permute.xlu0 %1301
        %1303 = vrot.lane.b32.xlu0 %v641, 32
        %v1304 = vpop.permute.xlu0 %1303
        %1305 = vrot.lane.b32.xlu0 %v643, 32
        %v1306 = vpop.permute.xlu0 %1305
        %1307 = vrot.lane.b32.xlu0 %v646, 32
        %v1308 = vpop.permute.xlu0 %1307
        %1309 = vrot.lane.b32.xlu0 %v648, 32
        %v1310 = vpop.permute.xlu0 %1309
        %1311 = vrot.lane.b32.xlu0 %v651, 32
        %v1312 = vpop.permute.xlu0 %1311
        %1313 = vrot.lane.b32.xlu0 %v653, 32
        %v1314 = vpop.permute.xlu0 %1313
        %1315 = vrot.lane.b32.xlu0 %v656, 32
        %v1316 = vpop.permute.xlu0 %1315
        %1317 = vrot.lane.b32.xlu0 %v658, 32
        %v1318 = vpop.permute.xlu0 %1317
        %1319 = vrot.lane.b32.xlu0 %v661, 32
        %v1320 = vpop.permute.xlu0 %1319
        %1321 = vrot.lane.b32.xlu0 %v663, 32
        %v1322 = vpop.permute.xlu0 %1321
        %1323 = vrot.lane.b32.xlu0 %v666, 32
        %v1324 = vpop.permute.xlu0 %1323
        %1325 = vrot.lane.b32.xlu0 %v668, 32
        %v1326 = vpop.permute.xlu0 %1325
        %1327 = vrot.lane.b32.xlu0 %v967, 32
        %v1328 = vpop.permute.xlu0 %1327
        %1329 = vrot.lane.b32.xlu0 %v969, 32
        %v1330 = vpop.permute.xlu0 %1329
        %1331 = vrot.lane.b32.xlu0 %v1268, 32
        %v1332 = vpop.permute.xlu0 %1331
        %1333 = vrot.lane.b32.xlu0 %v1270, 32
        %v1334 = vpop.permute.xlu0 %1333
        %vm1367 = vcmask 31744
        %v1368 = vsel %vm1367, %v308, %v493
        %v1369 = vsel %vm1367, %v309, %v495
        %v1370 = vsel %vm1367, %v311, %v497
        %v1371 = vsel %vm1367, %v312, %v499
        %v1372 = vsel %vm1367, %v314, %v501
        %v1373 = vsel %vm1367, %v315, %v503
        %v1374 = vsel %vm1367, %v317, %v505
        %v1375 = vsel %vm1367, %v318, %v507
        %v1376 = vsel %vm1367, %v320, %v509
        %v1377 = vsel %vm1367, %v321, %v511
        %v1378 = vsel %vm1367, %v323, %v513
        %v1379 = vsel %vm1367, %v324, %v515
        %v1380 = vsel %vm1367, %v326, %v517
        %v1381 = vsel %vm1367, %v327, %v519
        %v1382 = vsel %vm1367, %v329, %v521
        %v1383 = vsel %vm1367, %v330, %v523
        %v1384 = vsel %vm1367, %v332, %v525
        %v1385 = vsel %vm1367, %v333, %v527
        %v1386 = vsel %vm1367, %v335, %v529
        %v1387 = vsel %vm1367, %v336, %v531
        %v1388 = vsel %vm1367, %v338, %v533
        %v1389 = vsel %vm1367, %v339, %v535
        %v1390 = vsel %vm1367, %v341, %v537
        %v1391 = vsel %vm1367, %v342, %v539
        %v1392 = vsel %vm1367, %v344, %v541
        %v1393 = vsel %vm1367, %v345, %v543
        %v1394 = vsel %vm1367, %v347, %v545
        %v1395 = vsel %vm1367, %v348, %v547
        %v1396 = vsel %vm1367, %v350, %v549
        %v1397 = vsel %vm1367, %v351, %v551
        %v1398 = vsel %vm1367, %v353, %v553
        %v1399 = vsel %vm1367, %v354, %v555
        %vm1400 = vcmask 64512
        %v1401 = vsel %vm1400, %v1368, %v670
        %v1402 = vsel %vm1400, %v1369, %v672
        %v1403 = vsel %vm1400, %v1370, %v674
        %v1404 = vsel %vm1400, %v1371, %v676
        %v1405 = vsel %vm1400, %v1372, %v678
        %v1406 = vsel %vm1400, %v1373, %v680
        %v1407 = vsel %vm1400, %v1374, %v682
        %v1408 = vsel %vm1400, %v1375, %v684
        %v1409 = vsel %vm1400, %v1376, %v686
        %v1410 = vsel %vm1400, %v1377, %v688
        %v1411 = vsel %vm1400, %v1378, %v690
        %v1412 = vsel %vm1400, %v1379, %v692
        %v1413 = vsel %vm1400, %v1380, %v694
        %v1414 = vsel %vm1400, %v1381, %v696
        %v1415 = vsel %vm1400, %v1382, %v698
        %v1416 = vsel %vm1400, %v1383, %v700
        %v1417 = vsel %vm1400, %v1384, %v702
        %v1418 = vsel %vm1400, %v1385, %v704
        %v1419 = vsel %vm1400, %v1386, %v706
        %v1420 = vsel %vm1400, %v1387, %v708
        %v1421 = vsel %vm1400, %v1388, %v710
        %v1422 = vsel %vm1400, %v1389, %v712
        %v1423 = vsel %vm1400, %v1390, %v714
        %v1424 = vsel %vm1400, %v1391, %v716
        %v1425 = vsel %vm1400, %v1392, %v718
        %v1426 = vsel %vm1400, %v1393, %v720
        %v1427 = vsel %vm1400, %v1394, %v722
        %v1428 = vsel %vm1400, %v1395, %v724
        %v1429 = vsel %vm1400, %v1396, %v726
        %v1430 = vsel %vm1400, %v1397, %v728
        %v1431 = vsel %vm1400, %v1398, %v730
        %v1432 = vsel %vm1400, %v1399, %v732
        %vm1433 = vcmask 97280
        %v1434 = vsel %vm1433, %v1401, %v768
        %v1435 = vsel %vm1433, %v1402, %v770
        %v1436 = vsel %vm1433, %v1403, %v772
        %v1437 = vsel %vm1433, %v1404, %v774
        %v1438 = vsel %vm1433, %v1405, %v776
        %v1439 = vsel %vm1433, %v1406, %v778
        %v1440 = vsel %vm1433, %v1407, %v780
        %v1441 = vsel %vm1433, %v1408, %v782
        %v1442 = vsel %vm1433, %v1409, %v784
        %v1443 = vsel %vm1433, %v1410, %v786
        %v1444 = vsel %vm1433, %v1411, %v788
        %v1445 = vsel %vm1433, %v1412, %v790
        %v1446 = vsel %vm1433, %v1413, %v792
        %v1447 = vsel %vm1433, %v1414, %v794
        %v1448 = vsel %vm1433, %v1415, %v796
        %v1449 = vsel %vm1433, %v1416, %v798
        %v1450 = vsel %vm1433, %v1417, %v800
        %v1451 = vsel %vm1433, %v1418, %v802
        %v1452 = vsel %vm1433, %v1419, %v804
        %v1453 = vsel %vm1433, %v1420, %v806
        %v1454 = vsel %vm1433, %v1421, %v808
        %v1455 = vsel %vm1433, %v1422, %v810
        %v1456 = vsel %vm1433, %v1423, %v812
        %v1457 = vsel %vm1433, %v1424, %v814
        %v1458 = vsel %vm1433, %v1425, %v816
        %v1459 = vsel %vm1433, %v1426, %v818
        %v1460 = vsel %vm1433, %v1427, %v820
        %v1461 = vsel %vm1433, %v1428, %v822
        %v1462 = vsel %vm1433, %v1429, %v824
        %v1463 = vsel %vm1433, %v1430, %v826
        %v1464 = vsel %vm1433, %v1431, %v828
        %v1465 = vsel %vm1433, %v1432, %v830
        %vm1466 = vcmask 130048
        %v1467 = vsel %vm1466, %v1434, %v870
        %v1468 = vsel %vm1466, %v1435, %v872
        %v1469 = vsel %vm1466, %v1436, %v874
        %v1470 = vsel %vm1466, %v1437, %v876
        %v1471 = vsel %vm1466, %v1438, %v878
        %v1472 = vsel %vm1466, %v1439, %v880
        %v1473 = vsel %vm1466, %v1440, %v882
        %v1474 = vsel %vm1466, %v1441, %v884
        %v1475 = vsel %vm1466, %v1442, %v886
        %v1476 = vsel %vm1466, %v1443, %v888
        %v1477 = vsel %vm1466, %v1444, %v890
        %v1478 = vsel %vm1466, %v1445, %v892
        %v1479 = vsel %vm1466, %v1446, %v894
        %v1480 = vsel %vm1466, %v1447, %v896
        %v1481 = vsel %vm1466, %v1448, %v898
        %v1482 = vsel %vm1466, %v1449, %v900
        %v1483 = vsel %vm1466, %v1450, %v902
        %v1484 = vsel %vm1466, %v1451, %v904
        %v1485 = vsel %vm1466, %v1452, %v906
        %v1486 = vsel %vm1466, %v1453, %v908
        %v1487 = vsel %vm1466, %v1454, %v910
        %v1488 = vsel %vm1466, %v1455, %v912
        %v1489 = vsel %vm1466, %v1456, %v914
        %v1490 = vsel %vm1466, %v1457, %v916
        %v1491 = vsel %vm1466, %v1458, %v918
        %v1492 = vsel %vm1466, %v1459, %v920
        %v1493 = vsel %vm1466, %v1460, %v922
        %v1494 = vsel %vm1466, %v1461, %v924
        %v1495 = vsel %vm1466, %v1462, %v926
        %v1496 = vsel %vm1466, %v1463, %v928
        %v1497 = vsel %vm1466, %v1464, %v930
        %v1498 = vsel %vm1466, %v1465, %v932
        %vm1499 = vcmask 162816
        %v1500 = vsel %vm1499, %v1467, %v971
        %v1501 = vsel %vm1499, %v1468, %v973
        %v1502 = vsel %vm1499, %v1469, %v975
        %v1503 = vsel %vm1499, %v1470, %v977
        %v1504 = vsel %vm1499, %v1471, %v979
        %v1505 = vsel %vm1499, %v1472, %v981
        %v1506 = vsel %vm1499, %v1473, %v983
        %v1507 = vsel %vm1499, %v1474, %v985
        %v1508 = vsel %vm1499, %v1475, %v987
        %v1509 = vsel %vm1499, %v1476, %v989
        %v1510 = vsel %vm1499, %v1477, %v991
        %v1511 = vsel %vm1499, %v1478, %v993
        %v1512 = vsel %vm1499, %v1479, %v995
        %v1513 = vsel %vm1499, %v1480, %v997
        %v1514 = vsel %vm1499, %v1481, %v999
        %v1515 = vsel %vm1499, %v1482, %v1001
        %v1516 = vsel %vm1499, %v1483, %v1003
        %v1517 = vsel %vm1499, %v1484, %v1005
        %v1518 = vsel %vm1499, %v1485, %v1007
        %v1519 = vsel %vm1499, %v1486, %v1009
        %v1520 = vsel %vm1499, %v1487, %v1011
        %v1521 = vsel %vm1499, %v1488, %v1013
        %v1522 = vsel %vm1499, %v1489, %v1015
        %v1523 = vsel %vm1499, %v1490, %v1017
        %v1524 = vsel %vm1499, %v1491, %v1019
        %v1525 = vsel %vm1499, %v1492, %v1021
        %v1526 = vsel %vm1499, %v1493, %v1023
        %v1527 = vsel %vm1499, %v1494, %v1025
        %v1528 = vsel %vm1499, %v1495, %v1027
        %v1529 = vsel %vm1499, %v1496, %v1029
        %v1530 = vsel %vm1499, %v1497, %v1031
        %v1531 = vsel %vm1499, %v1498, %v1033
        %vm1532 = vcmask 195584
        %v1533 = vsel %vm1532, %v1500, %v1069
        %v1534 = vsel %vm1532, %v1501, %v1071
        %v1535 = vsel %vm1532, %v1502, %v1073
        %v1536 = vsel %vm1532, %v1503, %v1075
        %v1537 = vsel %vm1532, %v1504, %v1077
        %v1538 = vsel %vm1532, %v1505, %v1079
        %v1539 = vsel %vm1532, %v1506, %v1081
        %v1540 = vsel %vm1532, %v1507, %v1083
        %v1541 = vsel %vm1532, %v1508, %v1085
        %v1542 = vsel %vm1532, %v1509, %v1087
        %v1543 = vsel %vm1532, %v1510, %v1089
        %v1544 = vsel %vm1532, %v1511, %v1091
        %v1545 = vsel %vm1532, %v1512, %v1093
        %v1546 = vsel %vm1532, %v1513, %v1095
        %v1547 = vsel %vm1532, %v1514, %v1097
        %v1548 = vsel %vm1532, %v1515, %v1099
        %v1549 = vsel %vm1532, %v1516, %v1101
        %v1550 = vsel %vm1532, %v1517, %v1103
        %v1551 = vsel %vm1532, %v1518, %v1105
        %v1552 = vsel %vm1532, %v1519, %v1107
        %v1553 = vsel %vm1532, %v1520, %v1109
        %v1554 = vsel %vm1532, %v1521, %v1111
        %v1555 = vsel %vm1532, %v1522, %v1113
        %v1556 = vsel %vm1532, %v1523, %v1115
        %v1557 = vsel %vm1532, %v1524, %v1117
        %v1558 = vsel %vm1532, %v1525, %v1119
        %v1559 = vsel %vm1532, %v1526, %v1121
        %v1560 = vsel %vm1532, %v1527, %v1123
        %v1561 = vsel %vm1532, %v1528, %v1125
        %v1562 = vsel %vm1532, %v1529, %v1127
        %v1563 = vsel %vm1532, %v1530, %v1129
        %v1564 = vsel %vm1532, %v1531, %v1131
        %vm1565 = vcmask 228352
        %v1566 = vsel %vm1565, %v1533, %v1171
        %v1567 = vsel %vm1565, %v1534, %v1173
        %v1568 = vsel %vm1565, %v1535, %v1175
        %v1569 = vsel %vm1565, %v1536, %v1177
        %v1570 = vsel %vm1565, %v1537, %v1179
        %v1571 = vsel %vm1565, %v1538, %v1181
        %v1572 = vsel %vm1565, %v1539, %v1183
        %v1573 = vsel %vm1565, %v1540, %v1185
        %v1574 = vsel %vm1565, %v1541, %v1187
        %v1575 = vsel %vm1565, %v1542, %v1189
        %v1576 = vsel %vm1565, %v1543, %v1191
        %v1577 = vsel %vm1565, %v1544, %v1193
        %v1578 = vsel %vm1565, %v1545, %v1195
        %v1579 = vsel %vm1565, %v1546, %v1197
        %v1580 = vsel %vm1565, %v1547, %v1199
        %v1581 = vsel %vm1565, %v1548, %v1201
        %v1582 = vsel %vm1565, %v1549, %v1203
        %v1583 = vsel %vm1565, %v1550, %v1205
        %v1584 = vsel %vm1565, %v1551, %v1207
        %v1585 = vsel %vm1565, %v1552, %v1209
        %v1586 = vsel %vm1565, %v1553, %v1211
        %v1587 = vsel %vm1565, %v1554, %v1213
        %v1588 = vsel %vm1565, %v1555, %v1215
        %v1589 = vsel %vm1565, %v1556, %v1217
        %v1590 = vsel %vm1565, %v1557, %v1219
        %v1591 = vsel %vm1565, %v1558, %v1221
        %v1592 = vsel %vm1565, %v1559, %v1223
        %v1593 = vsel %vm1565, %v1560, %v1225
        %v1594 = vsel %vm1565, %v1561, %v1227
        %v1595 = vsel %vm1565, %v1562, %v1229
        %v1596 = vsel %vm1565, %v1563, %v1231
        %v1597 = vsel %vm1565, %v1564, %v1233
        %vm1598 = vcmask 261120
        %v1599 = vsel %vm1598, %v1566, %v1272
        %v1600 = vsel %vm1598, %v1567, %v1274
        %v1601 = vsel %vm1598, %v1568, %v1276
        %v1602 = vsel %vm1598, %v1569, %v1278
        %v1603 = vsel %vm1598, %v1570, %v1280
        %v1604 = vsel %vm1598, %v1571, %v1282
        %v1605 = vsel %vm1598, %v1572, %v1284
        %v1606 = vsel %vm1598, %v1573, %v1286
        %v1607 = vsel %vm1598, %v1574, %v1288
        %v1608 = vsel %vm1598, %v1575, %v1290
        %v1609 = vsel %vm1598, %v1576, %v1292
        %v1610 = vsel %vm1598, %v1577, %v1294
        %v1611 = vsel %vm1598, %v1578, %v1296
        %v1612 = vsel %vm1598, %v1579, %v1298
        %v1613 = vsel %vm1598, %v1580, %v1300
        %v1614 = vsel %vm1598, %v1581, %v1302
        %v1615 = vsel %vm1598, %v1582, %v1304
        %v1616 = vsel %vm1598, %v1583, %v1306
        %v1617 = vsel %vm1598, %v1584, %v1308
        %v1618 = vsel %vm1598, %v1585, %v1310
        %v1619 = vsel %vm1598, %v1586, %v1312
        %v1620 = vsel %vm1598, %v1587, %v1314
        %v1621 = vsel %vm1598, %v1588, %v1316
        %v1622 = vsel %vm1598, %v1589, %v1318
        %v1623 = vsel %vm1598, %v1590, %v1320
        %v1624 = vsel %vm1598, %v1591, %v1322
        %v1625 = vsel %vm1598, %v1592, %v1324
        %v1626 = vsel %vm1598, %v1593, %v1326
        %v1627 = vsel %vm1598, %v1594, %v1328
        %v1628 = vsel %vm1598, %v1595, %v1330
        %v1629 = vsel %vm1598, %v1596, %v1332
        %v1630 = vsel %vm1598, %v1597, %v1334
        %v1631 = vld [vmem:[%s2] sm:$0xff]
        %v1632 = vld [vmem:[%s2 + $0x8] sm:$0xff]
        %v1633 = vld [vmem:[%s2 + $0x10] sm:$0xff]
        %v1634 = vld [vmem:[%s2 + $0x18] sm:$0xff]
        %v1635 = vld [vmem:[%s2 + $0x20] sm:$0xf]
        %v1637 = vlaneseq
        %v1638 = vshrl.u32 %v1637, 7
        %v1639 = vsub.s32 0, %v1638
        %v1640 = vrot.slane %v362, %v1639
        %vm1642 = vcmask 293888
        %v1644 = vsel %vm1642, %v1599, 0
        %v1647 = vsel %vm1642, %v1600, 0
        %v1650 = vsel %vm1642, %v1601, 0
        %v1653 = vsel %vm1642, %v1602, 0
        %v1656 = vsel %vm1642, %v1603, 0
        %v1659 = vsel %vm1642, %v1604, 0
        %v1662 = vsel %vm1642, %v1605, 0
        %v1665 = vsel %vm1642, %v1606, 0
        %v1668 = vsel %vm1642, %v1607, 0
        %v1671 = vsel %vm1642, %v1608, 0
        %v1674 = vsel %vm1642, %v1609, 0
        %v1677 = vsel %vm1642, %v1610, 0
        %v1680 = vsel %vm1642, %v1611, 0
        %v1683 = vsel %vm1642, %v1612, 0
        %v1686 = vsel %vm1642, %v1613, 0
        %v1689 = vsel %vm1642, %v1614, 0
        %v1692 = vsel %vm1642, %v1615, 0
        %v1695 = vsel %vm1642, %v1616, 0
        %v1698 = vsel %vm1642, %v1617, 0
        %v1701 = vsel %vm1642, %v1618, 0
        %v1704 = vsel %vm1642, %v1619, 0
        %v1707 = vsel %vm1642, %v1620, 0
        %v1710 = vsel %vm1642, %v1621, 0
        %v1713 = vsel %vm1642, %v1622, 0
        %v1716 = vsel %vm1642, %v1623, 0
        %v1719 = vsel %vm1642, %v1624, 0
        %v1722 = vsel %vm1642, %v1625, 0
        %v1725 = vsel %vm1642, %v1626, 0
        %v1728 = vsel %vm1642, %v1627, 0
        %v1731 = vsel %vm1642, %v1628, 0
        %v1734 = vsel %vm1642, %v1629, 0
        %v1737 = vsel %vm1642, %v1630, 0
        %vm1739 = vcmask 1043456
        %v1741 = vsel %vm1739, %v1635, 0
        %1743 = vmatprep.subr.mxu0 0.0
        %1744 = vmatpush1.msra.mxu0 0.0
        %1745 = vmatprep.subr.mxu0 0.0
        %1746 = vmatpush1.msra.mxu0 0.0
        %1747 = vmatprep.subr.mxu0 0.0
        %1748 = vmatpush1.msra.mxu0 0.0
        %1749 = vmatprep.subr.mxu0 0.0
        %1750 = vmatpush1.msra.mxu0 0.0
        %1751 = vmatprep.subr.mxu0 0.0
        %1752 = vmatpush1.msra.mxu0 0.0
        %1753 = vmatprep.subr.mxu0 0.0
        %1754 = vmatpush1.msra.mxu0 0.0
        %1755 = vmatprep.subr.mxu0 0.0
        %1756 = vmatpush1.msra.mxu0 0.0
        %1757 = vmatprep.subr.mxu0 0.0
        %1758 = vmatpush1.msra.mxu0 0.0
        %1759 = vmatprep.subr.mxu0 0.0
        %1760 = vmatpush1.msra.mxu0 0.0
        %1761 = vmatprep.subr.mxu0 0.0
        %1762 = vmatpush1.msra.mxu0 0.0
        %1763 = vmatprep.subr.mxu0 0.0
        %1764 = vmatpush1.msra.mxu0 0.0
        %1765 = vmatprep.subr.mxu0 0.0
        %1766 = vmatpush1.msra.mxu0 %v1741
        %1767 = vmatprep.subr.mxu0 0.0
        %1768 = vmatpush1.msra.mxu0 %v1634
        %1769 = vmatprep.subr.mxu0 0.0
        %1770 = vmatpush1.msra.mxu0 %v1633
        %1771 = vmatprep.subr.mxu0 0.0
        %1772 = vmatpush1.msra.mxu0 %v1632
        %1773 = vmatprep.subr.mxu0 0.0
        %1774 = vmatpush1.msra.mxu0 %v1631
        %1775 = vmatprep.subr.mxu0 0.0
        %1776 = vmatpush2.msra.mxu0 0.0
        %1777 = vmatprep.subr.mxu0 0.0
        %1778 = vmatpush2.msra.mxu0 0.0
        %1779 = vmatprep.subr.mxu0 0.0
        %1780 = vmatpush2.msra.mxu0 0.0
        %1781 = vmatprep.subr.mxu0 0.0
        %1782 = vmatpush2.msra.mxu0 0.0
        %1783 = vmatprep.subr.mxu0 0.0
        %1784 = vmatpush2.msra.mxu0 0.0
        %1785 = vmatprep.subr.mxu0 0.0
        %1786 = vmatpush2.msra.mxu0 0.0
        %1787 = vmatprep.subr.mxu0 0.0
        %1788 = vmatpush2.msra.mxu0 0.0
        %1789 = vmatprep.subr.mxu0 0.0
        %1790 = vmatpush2.msra.mxu0 0.0
        %1791 = vmatprep.subr.mxu0 0.0
        %1792 = vmatpush2.msra.mxu0 0.0
        %1793 = vmatprep.subr.mxu0 0.0
        %1794 = vmatpush2.msra.mxu0 0.0
        %1795 = vmatprep.subr.mxu0 0.0
        %1796 = vmatpush2.msra.mxu0 0.0
        %1797 = vmatprep.subr.mxu0 0.0
        %1798 = vmatpush2.msra.mxu0 0.0
        %1799 = vmatprep.subr.mxu0 0.0
        %1800 = vmatpush2.msra.mxu0 0.0
        %1801 = vmatprep.subr.mxu0 0.0
        %1802 = vmatpush2.msra.mxu0 0.0
        %1803 = vmatprep.subr.mxu0 0.0
        %1804 = vmatpush2.msra.mxu0 0.0
        %1805 = vmatprep.subr.mxu0 0.0
        %1806 = vmatpush2.msra.mxu0 0.0
        %1807 = vmatprep.mubr.f32.mxu0 0.0
        %1808 = vmatmul.mubr.f32.gmra.mxu0 %v1644
        %v1809 = vpop.f32.mrf.mxu0
        %v1810 = vadd.f32 %v1640, %v1809
        %v1811 = vpop.f32.mrf.mxu0
        %1812 = vmatprep.mubr.f32.mxu0 0.0
        %1813 = vmatmul.mubr.f32.gmra.mxu0 %v1647
        %v1814 = vpop.f32.mrf.mxu0
        %v1815 = vadd.f32 %v1640, %v1814
        %v1816 = vpop.f32.mrf.mxu0
        %1817 = vmatprep.mubr.f32.mxu0 0.0
        %1818 = vmatmul.mubr.f32.gmra.mxu0 %v1650
        %v1819 = vpop.f32.mrf.mxu0
        %v1820 = vadd.f32 %v1640, %v1819
        %v1821 = vpop.f32.mrf.mxu0
        %1822 = vmatprep.mubr.f32.mxu0 0.0
        %1823 = vmatmul.mubr.f32.gmra.mxu0 %v1653
        %v1824 = vpop.f32.mrf.mxu0
        %v1825 = vadd.f32 %v1640, %v1824
        %v1826 = vpop.f32.mrf.mxu0
        %1827 = vmatprep.mubr.f32.mxu0 0.0
        %1828 = vmatmul.mubr.f32.gmra.mxu0 %v1656
        %v1829 = vpop.f32.mrf.mxu0
        %v1830 = vadd.f32 %v1640, %v1829
        %v1831 = vpop.f32.mrf.mxu0
        %1832 = vmatprep.mubr.f32.mxu0 0.0
        %1833 = vmatmul.mubr.f32.gmra.mxu0 %v1659
        %v1834 = vpop.f32.mrf.mxu0
        %v1835 = vadd.f32 %v1640, %v1834
        %v1836 = vpop.f32.mrf.mxu0
        %1837 = vmatprep.mubr.f32.mxu0 0.0
        %1838 = vmatmul.mubr.f32.gmra.mxu0 %v1662
        %v1839 = vpop.f32.mrf.mxu0
        %v1840 = vadd.f32 %v1640, %v1839
        %v1841 = vpop.f32.mrf.mxu0
        %1842 = vmatprep.mubr.f32.mxu0 0.0
        %1843 = vmatmul.mubr.f32.gmra.mxu0 %v1665
        %v1844 = vpop.f32.mrf.mxu0
        %v1845 = vadd.f32 %v1640, %v1844
        %v1846 = vpop.f32.mrf.mxu0
        %1847 = vmatprep.mubr.f32.mxu0 0.0
        %1848 = vmatmul.mubr.f32.gmra.mxu0 %v1668
        %v1849 = vpop.f32.mrf.mxu0
        %v1850 = vadd.f32 %v1640, %v1849
        %v1851 = vpop.f32.mrf.mxu0
        %1852 = vmatprep.mubr.f32.mxu0 0.0
        %1853 = vmatmul.mubr.f32.gmra.mxu0 %v1671
        %v1854 = vpop.f32.mrf.mxu0
        %v1855 = vadd.f32 %v1640, %v1854
        %v1856 = vpop.f32.mrf.mxu0
        %1857 = vmatprep.mubr.f32.mxu0 0.0
        %1858 = vmatmul.mubr.f32.gmra.mxu0 %v1674
        %v1859 = vpop.f32.mrf.mxu0
        %v1860 = vadd.f32 %v1640, %v1859
        %v1861 = vpop.f32.mrf.mxu0
        %1862 = vmatprep.mubr.f32.mxu0 0.0
        %1863 = vmatmul.mubr.f32.gmra.mxu0 %v1677
        %v1864 = vpop.f32.mrf.mxu0
        %v1865 = vadd.f32 %v1640, %v1864
        %v1866 = vpop.f32.mrf.mxu0
        %1867 = vmatprep.mubr.f32.mxu0 0.0
        %1868 = vmatmul.mubr.f32.gmra.mxu0 %v1680
        %v1869 = vpop.f32.mrf.mxu0
        %v1870 = vadd.f32 %v1640, %v1869
        %v1871 = vpop.f32.mrf.mxu0
        %1872 = vmatprep.mubr.f32.mxu0 0.0
        %1873 = vmatmul.mubr.f32.gmra.mxu0 %v1683
        %v1874 = vpop.f32.mrf.mxu0
        %v1875 = vadd.f32 %v1640, %v1874
        %v1876 = vpop.f32.mrf.mxu0
        %1877 = vmatprep.mubr.f32.mxu0 0.0
        %1878 = vmatmul.mubr.f32.gmra.mxu0 %v1686
        %v1879 = vpop.f32.mrf.mxu0
        %v1880 = vadd.f32 %v1640, %v1879
        %v1881 = vpop.f32.mrf.mxu0
        %1882 = vmatprep.mubr.f32.mxu0 0.0
        %1883 = vmatmul.mubr.f32.gmra.mxu0 %v1689
        %v1884 = vpop.f32.mrf.mxu0
        %v1885 = vadd.f32 %v1640, %v1884
        %v1886 = vpop.f32.mrf.mxu0
        %1887 = vmatprep.mubr.f32.mxu0 0.0
        %1888 = vmatmul.mubr.f32.gmra.mxu0 %v1692
        %v1889 = vpop.f32.mrf.mxu0
        %v1890 = vadd.f32 %v1640, %v1889
        %v1891 = vpop.f32.mrf.mxu0
        %1892 = vmatprep.mubr.f32.mxu0 0.0
        %1893 = vmatmul.mubr.f32.gmra.mxu0 %v1695
        %v1894 = vpop.f32.mrf.mxu0
        %v1895 = vadd.f32 %v1640, %v1894
        %v1896 = vpop.f32.mrf.mxu0
        %1897 = vmatprep.mubr.f32.mxu0 0.0
        %1898 = vmatmul.mubr.f32.gmra.mxu0 %v1698
        %v1899 = vpop.f32.mrf.mxu0
        %v1900 = vadd.f32 %v1640, %v1899
        %v1901 = vpop.f32.mrf.mxu0
        %1902 = vmatprep.mubr.f32.mxu0 0.0
        %1903 = vmatmul.mubr.f32.gmra.mxu0 %v1701
        %v1904 = vpop.f32.mrf.mxu0
        %v1905 = vadd.f32 %v1640, %v1904
        %v1906 = vpop.f32.mrf.mxu0
        %1907 = vmatprep.mubr.f32.mxu0 0.0
        %1908 = vmatmul.mubr.f32.gmra.mxu0 %v1704
        %v1909 = vpop.f32.mrf.mxu0
        %v1910 = vadd.f32 %v1640, %v1909
        %v1911 = vpop.f32.mrf.mxu0
        %1912 = vmatprep.mubr.f32.mxu0 0.0
        %1913 = vmatmul.mubr.f32.gmra.mxu0 %v1707
        %v1914 = vpop.f32.mrf.mxu0
        %v1915 = vadd.f32 %v1640, %v1914
        %v1916 = vpop.f32.mrf.mxu0
        %1917 = vmatprep.mubr.f32.mxu0 0.0
        %1918 = vmatmul.mubr.f32.gmra.mxu0 %v1710
        %v1919 = vpop.f32.mrf.mxu0
        %v1920 = vadd.f32 %v1640, %v1919
        %v1921 = vpop.f32.mrf.mxu0
        %1922 = vmatprep.mubr.f32.mxu0 0.0
        %1923 = vmatmul.mubr.f32.gmra.mxu0 %v1713
        %v1924 = vpop.f32.mrf.mxu0
        %v1925 = vadd.f32 %v1640, %v1924
        %v1926 = vpop.f32.mrf.mxu0
        %1927 = vmatprep.mubr.f32.mxu0 0.0
        %1928 = vmatmul.mubr.f32.gmra.mxu0 %v1716
        %v1929 = vpop.f32.mrf.mxu0
        %v1930 = vadd.f32 %v1640, %v1929
        %v1931 = vpop.f32.mrf.mxu0
        %1932 = vmatprep.mubr.f32.mxu0 0.0
        %1933 = vmatmul.mubr.f32.gmra.mxu0 %v1719
        %v1934 = vpop.f32.mrf.mxu0
        %v1935 = vadd.f32 %v1640, %v1934
        %v1936 = vpop.f32.mrf.mxu0
        %1937 = vmatprep.mubr.f32.mxu0 0.0
        %1938 = vmatmul.mubr.f32.gmra.mxu0 %v1722
        %v1939 = vpop.f32.mrf.mxu0
        %v1940 = vadd.f32 %v1640, %v1939
        %v1941 = vpop.f32.mrf.mxu0
        %1942 = vmatprep.mubr.f32.mxu0 0.0
        %1943 = vmatmul.mubr.f32.gmra.mxu0 %v1725
        %v1944 = vpop.f32.mrf.mxu0
        %v1945 = vadd.f32 %v1640, %v1944
        %v1946 = vpop.f32.mrf.mxu0
        %1947 = vmatprep.mubr.f32.mxu0 0.0
        %1948 = vmatmul.mubr.f32.gmra.mxu0 %v1728
        %v1949 = vpop.f32.mrf.mxu0
        %v1950 = vadd.f32 %v1640, %v1949
        %v1951 = vpop.f32.mrf.mxu0
        %1952 = vmatprep.mubr.f32.mxu0 0.0
        %1953 = vmatmul.mubr.f32.gmra.mxu0 %v1731
        %v1954 = vpop.f32.mrf.mxu0
        %v1955 = vadd.f32 %v1640, %v1954
        %v1956 = vpop.f32.mrf.mxu0
        %1957 = vmatprep.mubr.f32.mxu0 0.0
        %1958 = vmatmul.mubr.f32.gmra.mxu0 %v1734
        %v1959 = vpop.f32.mrf.mxu0
        %v1960 = vadd.f32 %v1640, %v1959
        %v1961 = vpop.f32.mrf.mxu0
        %1962 = vmatprep.mubr.f32.mxu0 0.0
        %1963 = vmatmul.mubr.f32.gmra.mxu0 %v1737
        %v1964 = vpop.f32.mrf.mxu0
        %v1965 = vadd.f32 %v1640, %v1964
        %v1966 = vpop.f32.mrf.mxu0
        %1967 = vdwg.mxu0
        %1968 = vst [vmem:[%s270] sm:$0xff] %v1810
        %1969 = vst [vmem:[%s270 + $0x8] sm:$0xff] %v1815
        %1970 = vst [vmem:[%s270 + $0x10] sm:$0xff] %v1820
        %1971 = vst [vmem:[%s270 + $0x18] sm:$0xff] %v1825
        %1972 = vst [vmem:[%s270 + $0x20] sm:$0xff] %v1830
        %1973 = vst [vmem:[%s270 + $0x28] sm:$0xff] %v1835
        %1974 = vst [vmem:[%s270 + $0x30] sm:$0xff] %v1840
        %1975 = vst [vmem:[%s270 + $0x38] sm:$0xff] %v1845
        %1976 = vst [vmem:[%s270 + $0x40] sm:$0xff] %v1850
        %1977 = vst [vmem:[%s270 + $0x48] sm:$0xff] %v1855
        %1978 = vst [vmem:[%s270 + $0x50] sm:$0xff] %v1860
        %1979 = vst [vmem:[%s270 + $0x58] sm:$0xff] %v1865
        %1980 = vst [vmem:[%s270 + $0x60] sm:$0xff] %v1870
        %1981 = vst [vmem:[%s270 + $0x68] sm:$0xff] %v1875
        %1982 = vst [vmem:[%s270 + $0x70] sm:$0xff] %v1880
        %1983 = vst [vmem:[%s270 + $0x78] sm:$0xff] %v1885
        %1984 = vst [vmem:[%s270 + $0x80] sm:$0xff] %v1890
        %1985 = vst [vmem:[%s270 + $0x88] sm:$0xff] %v1895
        %1986 = vst [vmem:[%s270 + $0x90] sm:$0xff] %v1900
        %1987 = vst [vmem:[%s270 + $0x98] sm:$0xff] %v1905
        %1988 = vst [vmem:[%s270 + $0xa0] sm:$0xff] %v1910
        %1989 = vst [vmem:[%s270 + $0xa8] sm:$0xff] %v1915
        %1990 = vst [vmem:[%s270 + $0xb0] sm:$0xff] %v1920
        %1991 = vst [vmem:[%s270 + $0xb8] sm:$0xff] %v1925
        %1992 = vst [vmem:[%s270 + $0xc0] sm:$0xff] %v1930
        %1993 = vst [vmem:[%s270 + $0xc8] sm:$0xff] %v1935
        %1994 = vst [vmem:[%s270 + $0xd0] sm:$0xff] %v1940
        %1995 = vst [vmem:[%s270 + $0xd8] sm:$0xff] %v1945
        %1996 = vst [vmem:[%s270 + $0xe0] sm:$0xff] %v1950
        %1997 = vst [vmem:[%s270 + $0xe8] sm:$0xff] %v1955
        %1998 = vst [vmem:[%s270 + $0xf0] sm:$0xff] %v1960
        %1999 = vst [vmem:[%s270 + $0xf8] sm:$0xff] %v1965
        %s2000 = sand.u32 %s142, 1
        %s2001 = scalar_lea.sflag [#allocation3], %s2000
        %s2002 = sand.u32 %s142, 1
        %s2003 = smul.addr %s2002, 256
        %s2004 = scalar_lea.vmem [#allocation2], %s2003
        // Predicated region
        $region37: #{tpu_custom_call.1} parent=35 // pred_check
          %p2005 = pneg %p152
        $region38: #{tpu_custom_call.1} parent=35 // pred_check_branch
          %2007 = sbr.rel (%p2005) target = $region40
        $region39: #{tpu_custom_call.1} parent=35 // pred_region
          %s2008 = smul.u32 16, %s23
          %s2010 = ssub.s32 4096, 4096
          %2011 = vsyncadd %s2001, %s2010
          %s2012 = smul.addr %s2008, 2
          %s2013 = smul.addr %s22, 32
          %s2014 = sadd.s32 %s2012, %s2013
          %s2015 = smul.addr %s2014, 128
          %s2016 = scalar_lea.hbm %s4, %s2015
          %s2017 = sshll.u32 %s2004, 4
          %s2018 = int_to_ptr.vmem [resolvable:$true] %s2017
          %2023 = dma.vmem_to_hbm [thread:$0]  %s2018, 4096, %s2016, %s2001, 128, 128, 8
        $region40: #{tpu_custom_call.1} parent=35 // pred_fallthru
          _
      $region36: #{tpu_custom_call.1} parent=5 // pred_fallthru
        _
      %p2024 = scmp.le.s32.totalorder 2, %s13
      // Predicated region
      $region41: #{tpu_custom_call.1} parent=5 // pred_check
        %p2025 = pneg %p2024
      $region42: #{tpu_custom_call.1} parent=5 // pred_check_branch
        %2027 = sbr.rel (%p2025) target = $region44
      $region43: #{tpu_custom_call.1} parent=5 // pred_region
        %s2028 = ssub.s32 %s13, 2
        // Predicated region
        $region45: #{tpu_custom_call.1} parent=43 // pred_check
          %p2029 = pneg %p158
        $region46: #{tpu_custom_call.1} parent=43 // pred_check_branch
          %2031 = sbr.rel (%p2029) target = $region48
        $region47: #{tpu_custom_call.1} parent=43 // pred_region
          %s2032 = sand.u32 %s143, 1
          %s2033 = scalar_lea.sflag [#allocation3], %s2032
          %s2034 = sand.u32 %s143, 1
          %s2035 = smul.addr %s2034, 256
          %s2036 = scalar_lea.vmem [#allocation2], %s2035
          %2037 = dma.done %s2033, 4096
        $region48: #{tpu_custom_call.1} parent=43 // pred_fallthru
          _
      $region44: #{tpu_custom_call.1} parent=5 // pred_fallthru
        _
    $region6: #{tpu_custom_call.1} parent=1 // loop_footer
      %s17 = sadd.s32 1, %s13
    $region7: #{tpu_custom_call.1} parent=1 // loop_footer_branch
      %12 = sbr.rel target = $region3
    $region8: #{tpu_custom_call.1} parent=1 // loop_exit
      _
    %2038 = vsyncpa [#allocation3], 1
    %s2039 = scalar_lea.sflag [#allocation3], 1
    %2040 = vsyncpa %s2039, 1

</llo_original>
